<compile_context>
chip_gen: v7x
topology: tpu7x:2x2x1
jax: 0.10.0
libtpu: 0.0.40
codegen_flags: <defaults>
</compile_context>

<pallas_src>
import functools

import jax
import jax.numpy as jnp
from jax.experimental import pallas as pl
from jax.experimental.pallas import tpu as pltpu

BN_EPS = 1e-5
_TARGET_TILE_PIXELS = 2048   # ~rows per grid step; keeps per-step VMEM small.


def _round_up(x, m):
    return (x + m - 1) // m * m


def _pick_tile_rows(nh, width):
    """Largest divisor of N*H giving <= ~_TARGET_TILE_PIXELS pixels per tile and an
    8-sublane-aligned (tile_rows * (W+2)) block (or the whole array)."""
    wp2 = width + 2
    cap = max(1, _TARGET_TILE_PIXELS // max(width, 1))
    cands = [d for d in range(1, nh + 1)
             if nh % d == 0 and d <= cap and ((d * wp2) % 8 == 0 or d == nh)]
    return max(cands) if cands else nh


# ---------------------------------------------------------------------------
# Pass A: conv (3 shifted matmuls) + masked per-channel sum / sum-of-squares.
# ---------------------------------------------------------------------------
def _conv_stats_kernel(x_ref, w_ref, mask_ref, y_ref, stats_ref):
    rows_blk = x_ref.shape[0]            # tile_rows * (W + 2)
    n_rows = rows_blk - 2                # last 2 rows of the slab are wrap junk
    cpad = y_ref.shape[1]

    # Conv as three horizontally shifted MXU matmuls (tap dx = 0, 1, 2), K = 3*Cin.
    acc = jnp.dot(x_ref[pl.ds(0, n_rows), :], w_ref[0],
                  preferred_element_type=jnp.float32)
    acc = acc + jnp.dot(x_ref[pl.ds(1, n_rows), :], w_ref[1],
                        preferred_element_type=jnp.float32)
    acc = acc + jnp.dot(x_ref[pl.ds(2, n_rows), :], w_ref[2],
                        preferred_element_type=jnp.float32)

    # Conv bias intentionally omitted: it cancels under training-mode BN centering.
    y_ref[pl.ds(0, n_rows), :] = acc
    y_ref[pl.ds(n_rows, 2), :] = jnp.zeros((2, cpad), jnp.float32)

    # BatchNorm statistics, fused single pass (sum and sum of squares), with the
    # two wrap columns per image row masked out.  Accumulated in a resident
    # (2, Cpad) output block across the whole grid.
    @pl.when(pl.program_id(0) == 0)
    def _():
        stats_ref[...] = jnp.zeros_like(stats_ref)

    masked = acc * mask_ref[pl.ds(0, n_rows), :]
    stats_ref[0:1, :] += jnp.sum(masked, axis=0, keepdims=True)
    stats_ref[1:2, :] += jnp.sum(masked * acc, axis=0, keepdims=True)


# ---------------------------------------------------------------------------
# Pass B: y * scale + shift, ReLU (scale/shift derived from the global stats).
# ---------------------------------------------------------------------------
def _bn_relu_kernel(y_ref, stats_ref, gb_ref, o_ref, *, count):
    inv_n = 1.0 / count
    mean = stats_ref[0:1, :] * inv_n
    var = stats_ref[1:2, :] * inv_n - mean * mean          # biased variance, f32
    scale = gb_ref[0:1, :] * jax.lax.rsqrt(var + BN_EPS)   # gamma / sqrt(var+eps)
    shift = gb_ref[1:2, :] - mean * scale                  # beta - mean*scale
    o_ref[...] = jnp.maximum(y_ref[...] * scale + shift, 0.0)


# ---------------------------------------------------------------------------
# One Conv3x3(reflect) -> BN -> ReLU block.
# ---------------------------------------------------------------------------
def _conv_bn_relu_block(x_nhwc, w, gamma, beta, tile_rows=None):
    n, h, width, cin = x_nhwc.shape
    cout = w.shape[0]
    cpad = _round_up(cout, 128)          # lane-dense output / matmul N-dim
    wp2 = width + 2
    nh = n * h

    tr = tile_rows if tile_rows is not None else _pick_tile_rows(nh, width)
    assert nh % tr == 0, (nh, tr)
    assert (tr * wp2) % 8 == 0 or tr == nh, (tr, wp2)
    num_tiles = nh // tr
    rows_blk = tr * wp2

    # ---- glue (pure data movement, no conv FLOPs) --------------------------
    # Reflect-pad H and W, unfold the 3 vertical taps onto the channel axis.
    xp = jnp.pad(x_nhwc, ((0, 0), (1, 1), (1, 1), (0, 0)), mode="reflect")
    xv = jnp.concatenate([xp[:, 0:h], xp[:, 1:h + 1], xp[:, 2:h + 2]], axis=-1)
    xcol = xv.reshape(nh * wp2, 3 * cin)          # row = (n, y, x in padded width)

    # Weights OIHW -> per-dx (3*Cin, Cpad) matrices; extra lanes zero-padded.
    w3 = jnp.transpose(w, (3, 2, 1, 0)).reshape(3, 3 * cin, cout)
    w3 = jnp.pad(w3, ((0, 0), (0, 0), (0, cpad - cout)))

    # gamma/beta packed into a single tiny operand (padded lanes stay 0 => output 0).
    gb = jnp.stack([jnp.pad(gamma, (0, cpad - cout)),
                    jnp.pad(beta, (0, cpad - cout))], axis=0)

    # Per-tile validity mask: 1 for real pixels, 0 for the 2 wrap columns per row.
    mask = (jnp.arange(rows_blk) % wp2 < width).astype(jnp.float32)[:, None]

    # ---- pass A: conv + BN statistics --------------------------------------
    y, stats = pl.pallas_call(
        _conv_stats_kernel,
        out_shape=(jax.ShapeDtypeStruct((nh * wp2, cpad), jnp.float32),
                   jax.ShapeDtypeStruct((2, cpad), jnp.float32)),
        grid=(num_tiles,),
        in_specs=[pl.BlockSpec((rows_blk, 3 * cin), lambda i: (i, 0)),
                  pl.BlockSpec((3, 3 * cin, cpad), lambda i: (0, 0, 0)),
                  pl.BlockSpec((rows_blk, 1), lambda i: (0, 0))],
        out_specs=(pl.BlockSpec((rows_blk, cpad), lambda i: (i, 0)),
                   pl.BlockSpec((2, cpad), lambda i: (0, 0))),
        compiler_params=pltpu.CompilerParams(
            dimension_semantics=("arbitrary",)),   # stats accumulate across tiles
    )(xcol, w3, mask)

    # ---- pass B: normalize + affine + ReLU ----------------------------------
    out = pl.pallas_call(
        functools.partial(_bn_relu_kernel, count=float(n * h * width)),
        out_shape=jax.ShapeDtypeStruct((nh * wp2, cpad), jnp.float32),
        grid=(num_tiles,),
        in_specs=[pl.BlockSpec((rows_blk, cpad), lambda i: (i, 0)),
                  pl.BlockSpec((2, cpad), lambda i: (0, 0)),
                  pl.BlockSpec((2, cpad), lambda i: (0, 0))],
        out_specs=pl.BlockSpec((rows_blk, cpad), lambda i: (i, 0)),
        compiler_params=pltpu.CompilerParams(
            dimension_semantics=("parallel",)),    # megacore-shardable on v7x
    )(y, stats, gb)

    # Drop wrap columns + lane padding (glue).
    return out.reshape(n, h, wp2, cpad)[:, :, :width, :cout]


def _base_double_conv(x_nchw, params, tile_rows=None):
    x = jnp.transpose(x_nchw, (0, 2, 3, 1))        # NCHW -> NHWC (interface glue)
    # NOTE: conv biases b1/b2 are not applied -- they cancel exactly under
    # training-mode BatchNorm mean subtraction.
    # TODO(synk): reintroduce the bias if eval-mode (running-stats) BN is added.
    y = _conv_bn_relu_block(x, params["w1"], params["g1"], params["beta1"], tile_rows)
    y = _conv_bn_relu_block(y, params["w2"], params["g2"], params["beta2"], tile_rows)
    return jnp.transpose(y, (0, 3, 1, 2))          # NHWC -> NCHW


base_double_conv = jax.jit(_base_double_conv, static_argnames=("tile_rows",))


def _reference(x_nchw, params):
    """Pure-JAX reference (lax.conv, incl. bias) for a correctness sanity check."""
    def block(x, w, b, g, bt):
        xp = jnp.pad(x, ((0, 0), (0, 0), (1, 1), (1, 1)), mode="reflect")
        y = jax.lax.conv_general_dilated(
            xp, w, window_strides=(1, 1), padding="VALID",
            dimension_numbers=("NCHW", "OIHW", "NCHW"),
            precision=jax.lax.Precision.HIGHEST)
        y = y + b[None, :, None, None]
        mean = jnp.mean(y, axis=(0, 2, 3), keepdims=True)
        var = jnp.mean((y - mean) ** 2, axis=(0, 2, 3), keepdims=True)
        y = (y - mean) * jax.lax.rsqrt(var + BN_EPS)
        y = y * g[None, :, None, None] + bt[None, :, None, None]
        return jnp.maximum(y, 0.0)

    y = block(x_nchw, params["w1"], params["b1"], params["g1"], params["beta1"])
    return block(y, params["w2"], params["b2"], params["g2"], params["beta2"])


if __name__ == "__main__":
    in_channels, out_channels = 4, 8
    N, H, W = 2, 16, 16

    key = jax.random.PRNGKey(0)
    kx, kw1, kb1, kw2, kb2 = jax.random.split(key, 5)

    x = jax.random.normal(kx, (N, in_channels, H, W), dtype=jnp.float32)

    params = {
        # Conv2d(in_channels, out_channels, 3): weight OIHW, bias (Cout,)
        "w1": jax.random.normal(kw1, (out_channels, in_channels, 3, 3),
                                dtype=jnp.float32) * 0.1,
        "b1": jax.random.normal(kb1, (out_channels,), dtype=jnp.float32) * 0.1,
        # BatchNorm2d default init: gamma=1, beta=0
        "g1": jnp.ones((out_channels,), jnp.float32),
        "beta1": jnp.zeros((out_channels,), jnp.float32),
        # Second conv block
        "w2": jax.random.normal(kw2, (out_channels, out_channels, 3, 3),
                                dtype=jnp.float32) * 0.1,
        "b2": jax.random.normal(kb2, (out_channels,), dtype=jnp.float32) * 0.1,
        "g2": jnp.ones((out_channels,), jnp.float32),
        "beta2": jnp.zeros((out_channels,), jnp.float32),
    }

    # tile_rows=8 => 4 grid steps per pass: exercises the cross-tile BN-stats
    # accumulator and the pipelined tiling even at this small test size.
    out = jax.block_until_ready(base_double_conv(x, params, tile_rows=8))
    assert out.shape == (N, out_channels, H, W), out.shape

    ref = jax.block_until_ready(_reference(x, params))
    assert jnp.allclose(out, ref, atol=1e-2, rtol=1e-2), \
        float(jnp.max(jnp.abs(out - ref)))

    print("KERNEL_OK")
</pallas_src>

<mosaic_0001>
module attributes {stable_mosaic.version = 11 : i64} {
  func.func @_conv_stats_kernel(%arg0: i32, %arg1: memref<144x12xf32, #tpu.memory_space<vmem>>, %arg2: memref<3x12x128xf32, #tpu.memory_space<vmem>>, %arg3: memref<144x1xf32, #tpu.memory_space<vmem>>, %arg4: memref<144x128xf32, #tpu.memory_space<vmem>>, %arg5: memref<2x128xf32, #tpu.memory_space<vmem>>) attributes {dimension_semantics = [#tpu.dimension_semantics<arbitrary>], iteration_bounds = array<i64: 4>, scalar_prefetch = 0 : i64, scratch_operands = 0 : i64, tpu.core_type = #tpu.core_type<tc>, window_params = [{transform_indices = @transform_0, window_bounds = array<i64: 144, 12>}, {pipeline_mode = #tpu.pipeline_mode<synchronous>, transform_indices = @transform_1, window_bounds = array<i64: 3, 12, 128>}, {pipeline_mode = #tpu.pipeline_mode<synchronous>, transform_indices = @transform_2, window_bounds = array<i64: 144, 1>}, {transform_indices = @transform_3, window_bounds = array<i64: 144, 128>}, {pipeline_mode = #tpu.pipeline_mode<synchronous>, transform_indices = @transform_4, window_bounds = array<i64: 2, 128>}]} {
    %c0 = arith.constant 0 : index
    %c0_0 = arith.constant 0 : index
    %0 = vector.load %arg1[%c0, %c0_0] : memref<144x12xf32, #tpu.memory_space<vmem>>, vector<142x12xf32>
    %c0_1 = arith.constant 0 : index
    %c0_2 = arith.constant 0 : index
    %c0_3 = arith.constant 0 : index
    %1 = vector.load %arg2[%c0_1, %c0_2, %c0_3] : memref<3x12x128xf32, #tpu.memory_space<vmem>>, vector<1x12x128xf32>
    %2 = vector.shape_cast %1 : vector<1x12x128xf32> to vector<12x128xf32>
    %cst = arith.constant dense<0.000000e+00> : vector<142x128xf32>
    %3 = tpu.matmul %0, %2, %cst {dimension_numbers = #tpu.dot_dimension_numbers<[1], [0], [0], [1], [0, 0, 1, 1], [], []>} : vector<142x12xf32>, vector<12x128xf32>, vector<142x128xf32> -> vector<142x128xf32>
    %c1 = arith.constant 1 : index
    %c0_4 = arith.constant 0 : index
    %4 = vector.load %arg1[%c1, %c0_4] : memref<144x12xf32, #tpu.memory_space<vmem>>, vector<142x12xf32>
    %c1_5 = arith.constant 1 : index
    %c0_6 = arith.constant 0 : index
    %c0_7 = arith.constant 0 : index
    %5 = vector.load %arg2[%c1_5, %c0_6, %c0_7] : memref<3x12x128xf32, #tpu.memory_space<vmem>>, vector<1x12x128xf32>
    %6 = vector.shape_cast %5 : vector<1x12x128xf32> to vector<12x128xf32>
    %cst_8 = arith.constant dense<0.000000e+00> : vector<142x128xf32>
    %7 = tpu.matmul %4, %6, %cst_8 {dimension_numbers = #tpu.dot_dimension_numbers<[1], [0], [0], [1], [0, 0, 1, 1], [], []>} : vector<142x12xf32>, vector<12x128xf32>, vector<142x128xf32> -> vector<142x128xf32>
    %8 = arith.addf %3, %7 : vector<142x128xf32>
    %c2 = arith.constant 2 : index
    %c0_9 = arith.constant 0 : index
    %9 = vector.load %arg1[%c2, %c0_9] : memref<144x12xf32, #tpu.memory_space<vmem>>, vector<142x12xf32>
    %c2_10 = arith.constant 2 : index
    %c0_11 = arith.constant 0 : index
    %c0_12 = arith.constant 0 : index
    %10 = vector.load %arg2[%c2_10, %c0_11, %c0_12] : memref<3x12x128xf32, #tpu.memory_space<vmem>>, vector<1x12x128xf32>
    %11 = vector.shape_cast %10 : vector<1x12x128xf32> to vector<12x128xf32>
    %cst_13 = arith.constant dense<0.000000e+00> : vector<142x128xf32>
    %12 = tpu.matmul %9, %11, %cst_13 {dimension_numbers = #tpu.dot_dimension_numbers<[1], [0], [0], [1], [0, 0, 1, 1], [], []>} : vector<142x12xf32>, vector<12x128xf32>, vector<142x128xf32> -> vector<142x128xf32>
    %13 = arith.addf %8, %12 : vector<142x128xf32>
    %c0_14 = arith.constant 0 : index
    %c0_15 = arith.constant 0 : index
    %14 = vector.load %arg4[%c0_14, %c0_15] : memref<144x128xf32, #tpu.memory_space<vmem>>, vector<142x128xf32>
    tpu.vector_store %arg4[%c0_14, %c0_15], %13 {strides = array<i32>} : memref<144x128xf32, #tpu.memory_space<vmem>>, vector<142x128xf32>,
    %cst_16 = arith.constant 0.000000e+00 : f32
    %15 = vector.broadcast %cst_16 : f32 to vector<2x128xf32>
    %c142 = arith.constant 142 : index
    %c0_17 = arith.constant 0 : index
    %16 = vector.load %arg4[%c142, %c0_17] : memref<144x128xf32, #tpu.memory_space<vmem>>, vector<2x128xf32>
    tpu.vector_store %arg4[%c142, %c0_17], %15 {strides = array<i32>} : memref<144x128xf32, #tpu.memory_space<vmem>>, vector<2x128xf32>,
    %c0_i32 = arith.constant 0 : i32
    %17 = arith.cmpi eq, %arg0, %c0_i32 : i32
    %18 = arith.extui %17 : i1 to i32
    %c0_i32_18 = arith.constant 0 : i32
    %19 = arith.cmpi ne, %18, %c0_i32_18 : i32
    scf.if %19 {
      %cst_31 = arith.constant 0.000000e+00 : f32
      %34 = vector.broadcast %cst_31 : f32 to vector<2x128xf32>
      %c0_32 = arith.constant 0 : index
      %c0_33 = arith.constant 0 : index
      %35 = vector.load %arg5[%c0_32, %c0_33] : memref<2x128xf32, #tpu.memory_space<vmem>>, vector<2x128xf32>
      tpu.vector_store %arg5[%c0_32, %c0_33], %34 {strides = array<i32>} : memref<2x128xf32, #tpu.memory_space<vmem>>, vector<2x128xf32>,
    } else {
    }
    %c0_19 = arith.constant 0 : index
    %c0_20 = arith.constant 0 : index
    %20 = vector.load %arg3[%c0_19, %c0_20] : memref<144x1xf32, #tpu.memory_space<vmem>>, vector<142x1xf32>
    %21 = vector.broadcast %20 : vector<142x1xf32> to vector<142x128xf32>
    %22 = arith.mulf %13, %21 : vector<142x128xf32>
    %c0_21 = arith.constant 0 : index
    %c0_22 = arith.constant 0 : index
    %23 = vector.load %arg5[%c0_21, %c0_22] : memref<2x128xf32, #tpu.memory_space<vmem>>, vector<1x128xf32>
    %cst_23 = arith.constant dense<0.000000e+00> : vector<128xf32>
    %24 = vector.multi_reduction <add>, %22, %cst_23 [0] : vector<142x128xf32> to vector<128xf32>
    %25 = vector.shape_cast %24 : vector<128xf32> to vector<1x128xf32>
    %26 = arith.addf %23, %25 : vector<1x128xf32>
    %c0_24 = arith.constant 0 : index
    %c0_25 = arith.constant 0 : index
    %27 = vector.load %arg5[%c0_24, %c0_25] : memref<2x128xf32, #tpu.memory_space<vmem>>, vector<1x128xf32>
    tpu.vector_store %arg5[%c0_24, %c0_25], %26 {strides = array<i32>} : memref<2x128xf32, #tpu.memory_space<vmem>>, vector<1x128xf32>,
    %c1_26 = arith.constant 1 : index
    %c0_27 = arith.constant 0 : index
    %28 = vector.load %arg5[%c1_26, %c0_27] : memref<2x128xf32, #tpu.memory_space<vmem>>, vector<1x128xf32>
    %29 = arith.mulf %22, %13 : vector<142x128xf32>
    %cst_28 = arith.constant dense<0.000000e+00> : vector<128xf32>
    %30 = vector.multi_reduction <add>, %29, %cst_28 [0] : vector<142x128xf32> to vector<128xf32>
    %31 = vector.shape_cast %30 : vector<128xf32> to vector<1x128xf32>
    %32 = arith.addf %28, %31 : vector<1x128xf32>
    %c1_29 = arith.constant 1 : index
    %c0_30 = arith.constant 0 : index
    %33 = vector.load %arg5[%c1_29, %c0_30] : memref<2x128xf32, #tpu.memory_space<vmem>>, vector<1x128xf32>
    tpu.vector_store %arg5[%c1_29, %c0_30], %32 {strides = array<i32>} : memref<2x128xf32, #tpu.memory_space<vmem>>, vector<1x128xf32>,
    return
  }
  func.func @transform_0(%arg0: i32) -> (i32, i32) {
    %c0_i32 = arith.constant 0 : i32
    %c0_i32_0 = arith.constant 0 : i32
    return %arg0, %c0_i32 : i32, i32
  }
  func.func @transform_1(%arg0: i32) -> (i32, i32, i32) {
    %c0_i32 = arith.constant 0 : i32
    %c0_i32_0 = arith.constant 0 : i32
    %c0_i32_1 = arith.constant 0 : i32
    %c0_i32_2 = arith.constant 0 : i32
    return %c0_i32, %c0_i32_0, %c0_i32_1 : i32, i32, i32
  }
  func.func @transform_2(%arg0: i32) -> (i32, i32) {
    %c0_i32 = arith.constant 0 : i32
    %c0_i32_0 = arith.constant 0 : i32
    %c0_i32_1 = arith.constant 0 : i32
    return %c0_i32, %c0_i32_0 : i32, i32
  }
  func.func @transform_3(%arg0: i32) -> (i32, i32) {
    %c0_i32 = arith.constant 0 : i32
    %c0_i32_0 = arith.constant 0 : i32
    return %arg0, %c0_i32 : i32, i32
  }
  func.func @transform_4(%arg0: i32) -> (i32, i32) {
    %c0_i32 = arith.constant 0 : i32
    %c0_i32_0 = arith.constant 0 : i32
    %c0_i32_1 = arith.constant 0 : i32
    return %c0_i32, %c0_i32_0 : i32, i32
  }
}

module attributes {stable_mosaic.version = 11 : i64} {
  func.func @_bn_relu_kernel(%arg0: i32, %arg1: memref<144x128xf32, #tpu.memory_space<vmem>>, %arg2: memref<2x128xf32, #tpu.memory_space<vmem>>, %arg3: memref<2x128xf32, #tpu.memory_space<vmem>>, %arg4: memref<144x128xf32, #tpu.memory_space<vmem>>) attributes {dimension_semantics = [#tpu.dimension_semantics<parallel>], iteration_bounds = array<i64: 4>, scalar_prefetch = 0 : i64, scratch_operands = 0 : i64, tpu.core_type = #tpu.core_type<tc>, window_params = [{transform_indices = @transform_0, window_bounds = array<i64: 144, 128>}, {pipeline_mode = #tpu.pipeline_mode<synchronous>, transform_indices = @transform_1, window_bounds = array<i64: 2, 128>}, {pipeline_mode = #tpu.pipeline_mode<synchronous>, transform_indices = @transform_2, window_bounds = array<i64: 2, 128>}, {transform_indices = @transform_3, window_bounds = array<i64: 144, 128>}]} {
    %c0 = arith.constant 0 : index
    %c0_0 = arith.constant 0 : index
    %0 = vector.load %arg2[%c0, %c0_0] : memref<2x128xf32, #tpu.memory_space<vmem>>, vector<1x128xf32>
    %cst = arith.constant 0.001953125 : f32
    %1 = vector.broadcast %cst : f32 to vector<1x128xf32>
    %2 = arith.mulf %0, %1 : vector<1x128xf32>
    %c1 = arith.constant 1 : index
    %c0_1 = arith.constant 0 : index
    %3 = vector.load %arg2[%c1, %c0_1] : memref<2x128xf32, #tpu.memory_space<vmem>>, vector<1x128xf32>
    %cst_2 = arith.constant 0.001953125 : f32
    %4 = vector.broadcast %cst_2 : f32 to vector<1x128xf32>
    %5 = arith.mulf %3, %4 : vector<1x128xf32>
    %6 = arith.mulf %2, %2 : vector<1x128xf32>
    %7 = arith.subf %5, %6 : vector<1x128xf32>
    %c0_3 = arith.constant 0 : index
    %c0_4 = arith.constant 0 : index
    %8 = vector.load %arg3[%c0_3, %c0_4] : memref<2x128xf32, #tpu.memory_space<vmem>>, vector<1x128xf32>
    %cst_5 = arith.constant 9.99999974E-6 : f32
    %9 = vector.broadcast %cst_5 : f32 to vector<1x128xf32>
    %10 = arith.addf %7, %9 : vector<1x128xf32>
    %11 = math.rsqrt %10 : vector<1x128xf32>
    %12 = arith.mulf %8, %11 : vector<1x128xf32>
    %c1_6 = arith.constant 1 : index
    %c0_7 = arith.constant 0 : index
    %13 = vector.load %arg3[%c1_6, %c0_7] : memref<2x128xf32, #tpu.memory_space<vmem>>, vector<1x128xf32>
    %14 = arith.mulf %2, %12 : vector<1x128xf32>
    %15 = arith.subf %13, %14 : vector<1x128xf32>
    %c0_8 = arith.constant 0 : index
    %c0_9 = arith.constant 0 : index
    %16 = vector.load %arg1[%c0_8, %c0_9] : memref<144x128xf32, #tpu.memory_space<vmem>>, vector<144x128xf32>
    %17 = vector.broadcast %12 : vector<1x128xf32> to vector<144x128xf32>
    %18 = arith.mulf %16, %17 : vector<144x128xf32>
    %19 = vector.broadcast %15 : vector<1x128xf32> to vector<144x128xf32>
    %20 = arith.addf %18, %19 : vector<144x128xf32>
    %cst_10 = arith.constant 0.000000e+00 : f32
    %21 = vector.broadcast %cst_10 : f32 to vector<144x128xf32>
    %22 = arith.maximumf %20, %21 : vector<144x128xf32>
    %c0_11 = arith.constant 0 : index
    %c0_12 = arith.constant 0 : index
    %23 = vector.load %arg4[%c0_11, %c0_12] : memref<144x128xf32, #tpu.memory_space<vmem>>, vector<144x128xf32>
    tpu.vector_store %arg4[%c0_11, %c0_12], %22 {strides = array<i32>} : memref<144x128xf32, #tpu.memory_space<vmem>>, vector<144x128xf32>,
    return
  }
  func.func @transform_0(%arg0: i32) -> (i32, i32) {
    %c0_i32 = arith.constant 0 : i32
    %c0_i32_0 = arith.constant 0 : i32
    return %arg0, %c0_i32 : i32, i32
  }
  func.func @transform_1(%arg0: i32) -> (i32, i32) {
    %c0_i32 = arith.constant 0 : i32
    %c0_i32_0 = arith.constant 0 : i32
    %c0_i32_1 = arith.constant 0 : i32
    return %c0_i32, %c0_i32_0 : i32, i32
  }
  func.func @transform_2(%arg0: i32) -> (i32, i32) {
    %c0_i32 = arith.constant 0 : i32
    %c0_i32_0 = arith.constant 0 : i32
    %c0_i32_1 = arith.constant 0 : i32
    return %c0_i32, %c0_i32_0 : i32, i32
  }
  func.func @transform_3(%arg0: i32) -> (i32, i32) {
    %c0_i32 = arith.constant 0 : i32
    %c0_i32_0 = arith.constant 0 : i32
    return %arg0, %c0_i32 : i32, i32
  }
}

module attributes {stable_mosaic.version = 11 : i64} {
  func.func @_conv_stats_kernel(%arg0: i32, %arg1: memref<144x24xf32, #tpu.memory_space<vmem>>, %arg2: memref<3x24x128xf32, #tpu.memory_space<vmem>>, %arg3: memref<144x1xf32, #tpu.memory_space<vmem>>, %arg4: memref<144x128xf32, #tpu.memory_space<vmem>>, %arg5: memref<2x128xf32, #tpu.memory_space<vmem>>) attributes {dimension_semantics = [#tpu.dimension_semantics<arbitrary>], iteration_bounds = array<i64: 4>, scalar_prefetch = 0 : i64, scratch_operands = 0 : i64, tpu.core_type = #tpu.core_type<tc>, window_params = [{transform_indices = @transform_0, window_bounds = array<i64: 144, 24>}, {pipeline_mode = #tpu.pipeline_mode<synchronous>, transform_indices = @transform_1, window_bounds = array<i64: 3, 24, 128>}, {pipeline_mode = #tpu.pipeline_mode<synchronous>, transform_indices = @transform_2, window_bounds = array<i64: 144, 1>}, {transform_indices = @transform_3, window_bounds = array<i64: 144, 128>}, {pipeline_mode = #tpu.pipeline_mode<synchronous>, transform_indices = @transform_4, window_bounds = array<i64: 2, 128>}]} {
    %c0 = arith.constant 0 : index
    %c0_0 = arith.constant 0 : index
    %0 = vector.load %arg1[%c0, %c0_0] : memref<144x24xf32, #tpu.memory_space<vmem>>, vector<142x24xf32>
    %c0_1 = arith.constant 0 : index
    %c0_2 = arith.constant 0 : index
    %c0_3 = arith.constant 0 : index
    %1 = vector.load %arg2[%c0_1, %c0_2, %c0_3] : memref<3x24x128xf32, #tpu.memory_space<vmem>>, vector<1x24x128xf32>
    %2 = vector.shape_cast %1 : vector<1x24x128xf32> to vector<24x128xf32>
    %cst = arith.constant dense<0.000000e+00> : vector<142x128xf32>
    %3 = tpu.matmul %0, %2, %cst {dimension_numbers = #tpu.dot_dimension_numbers<[1], [0], [0], [1], [0, 0, 1, 1], [], []>} : vector<142x24xf32>, vector<24x128xf32>, vector<142x128xf32> -> vector<142x128xf32>
    %c1 = arith.constant 1 : index
    %c0_4 = arith.constant 0 : index
    %4 = vector.load %arg1[%c1, %c0_4] : memref<144x24xf32, #tpu.memory_space<vmem>>, vector<142x24xf32>
    %c1_5 = arith.constant 1 : index
    %c0_6 = arith.constant 0 : index
    %c0_7 = arith.constant 0 : index
    %5 = vector.load %arg2[%c1_5, %c0_6, %c0_7] : memref<3x24x128xf32, #tpu.memory_space<vmem>>, vector<1x24x128xf32>
    %6 = vector.shape_cast %5 : vector<1x24x128xf32> to vector<24x128xf32>
    %cst_8 = arith.constant dense<0.000000e+00> : vector<142x128xf32>
    %7 = tpu.matmul %4, %6, %cst_8 {dimension_numbers = #tpu.dot_dimension_numbers<[1], [0], [0], [1], [0, 0, 1, 1], [], []>} : vector<142x24xf32>, vector<24x128xf32>, vector<142x128xf32> -> vector<142x128xf32>
    %8 = arith.addf %3, %7 : vector<142x128xf32>
    %c2 = arith.constant 2 : index
    %c0_9 = arith.constant 0 : index
    %9 = vector.load %arg1[%c2, %c0_9] : memref<144x24xf32, #tpu.memory_space<vmem>>, vector<142x24xf32>
    %c2_10 = arith.constant 2 : index
    %c0_11 = arith.constant 0 : index
    %c0_12 = arith.constant 0 : index
    %10 = vector.load %arg2[%c2_10, %c0_11, %c0_12] : memref<3x24x128xf32, #tpu.memory_space<vmem>>, vector<1x24x128xf32>
    %11 = vector.shape_cast %10 : vector<1x24x128xf32> to vector<24x128xf32>
    %cst_13 = arith.constant dense<0.000000e+00> : vector<142x128xf32>
    %12 = tpu.matmul %9, %11, %cst_13 {dimension_numbers = #tpu.dot_dimension_numbers<[1], [0], [0], [1], [0, 0, 1, 1], [], []>} : vector<142x24xf32>, vector<24x128xf32>, vector<142x128xf32> -> vector<142x128xf32>
    %13 = arith.addf %8, %12 : vector<142x128xf32>
    %c0_14 = arith.constant 0 : index
    %c0_15 = arith.constant 0 : index
    %14 = vector.load %arg4[%c0_14, %c0_15] : memref<144x128xf32, #tpu.memory_space<vmem>>, vector<142x128xf32>
    tpu.vector_store %arg4[%c0_14, %c0_15], %13 {strides = array<i32>} : memref<144x128xf32, #tpu.memory_space<vmem>>, vector<142x128xf32>,
    %cst_16 = arith.constant 0.000000e+00 : f32
    %15 = vector.broadcast %cst_16 : f32 to vector<2x128xf32>
    %c142 = arith.constant 142 : index
    %c0_17 = arith.constant 0 : index
    %16 = vector.load %arg4[%c142, %c0_17] : memref<144x128xf32, #tpu.memory_space<vmem>>, vector<2x128xf32>
    tpu.vector_store %arg4[%c142, %c0_17], %15 {strides = array<i32>} : memref<144x128xf32, #tpu.memory_space<vmem>>, vector<2x128xf32>,
    %c0_i32 = arith.constant 0 : i32
    %17 = arith.cmpi eq, %arg0, %c0_i32 : i32
    %18 = arith.extui %17 : i1 to i32
    %c0_i32_18 = arith.constant 0 : i32
    %19 = arith.cmpi ne, %18, %c0_i32_18 : i32
    scf.if %19 {
      %cst_31 = arith.constant 0.000000e+00 : f32
      %34 = vector.broadcast %cst_31 : f32 to vector<2x128xf32>
      %c0_32 = arith.constant 0 : index
      %c0_33 = arith.constant 0 : index
      %35 = vector.load %arg5[%c0_32, %c0_33] : memref<2x128xf32, #tpu.memory_space<vmem>>, vector<2x128xf32>
      tpu.vector_store %arg5[%c0_32, %c0_33], %34 {strides = array<i32>} : memref<2x128xf32, #tpu.memory_space<vmem>>, vector<2x128xf32>,
    } else {
    }
    %c0_19 = arith.constant 0 : index
    %c0_20 = arith.constant 0 : index
    %20 = vector.load %arg3[%c0_19, %c0_20] : memref<144x1xf32, #tpu.memory_space<vmem>>, vector<142x1xf32>
    %21 = vector.broadcast %20 : vector<142x1xf32> to vector<142x128xf32>
    %22 = arith.mulf %13, %21 : vector<142x128xf32>
    %c0_21 = arith.constant 0 : index
    %c0_22 = arith.constant 0 : index
    %23 = vector.load %arg5[%c0_21, %c0_22] : memref<2x128xf32, #tpu.memory_space<vmem>>, vector<1x128xf32>
    %cst_23 = arith.constant dense<0.000000e+00> : vector<128xf32>
    %24 = vector.multi_reduction <add>, %22, %cst_23 [0] : vector<142x128xf32> to vector<128xf32>
    %25 = vector.shape_cast %24 : vector<128xf32> to vector<1x128xf32>
    %26 = arith.addf %23, %25 : vector<1x128xf32>
    %c0_24 = arith.constant 0 : index
    %c0_25 = arith.constant 0 : index
    %27 = vector.load %arg5[%c0_24, %c0_25] : memref<2x128xf32, #tpu.memory_space<vmem>>, vector<1x128xf32>
    tpu.vector_store %arg5[%c0_24, %c0_25], %26 {strides = array<i32>} : memref<2x128xf32, #tpu.memory_space<vmem>>, vector<1x128xf32>,
    %c1_26 = arith.constant 1 : index
    %c0_27 = arith.constant 0 : index
    %28 = vector.load %arg5[%c1_26, %c0_27] : memref<2x128xf32, #tpu.memory_space<vmem>>, vector<1x128xf32>
    %29 = arith.mulf %22, %13 : vector<142x128xf32>
    %cst_28 = arith.constant dense<0.000000e+00> : vector<128xf32>
    %30 = vector.multi_reduction <add>, %29, %cst_28 [0] : vector<142x128xf32> to vector<128xf32>
    %31 = vector.shape_cast %30 : vector<128xf32> to vector<1x128xf32>
    %32 = arith.addf %28, %31 : vector<1x128xf32>
    %c1_29 = arith.constant 1 : index
    %c0_30 = arith.constant 0 : index
    %33 = vector.load %arg5[%c1_29, %c0_30] : memref<2x128xf32, #tpu.memory_space<vmem>>, vector<1x128xf32>
    tpu.vector_store %arg5[%c1_29, %c0_30], %32 {strides = array<i32>} : memref<2x128xf32, #tpu.memory_space<vmem>>, vector<1x128xf32>,
    return
  }
  func.func @transform_0(%arg0: i32) -> (i32, i32) {
    %c0_i32 = arith.constant 0 : i32
    %c0_i32_0 = arith.constant 0 : i32
    return %arg0, %c0_i32 : i32, i32
  }
  func.func @transform_1(%arg0: i32) -> (i32, i32, i32) {
    %c0_i32 = arith.constant 0 : i32
    %c0_i32_0 = arith.constant 0 : i32
    %c0_i32_1 = arith.constant 0 : i32
    %c0_i32_2 = arith.constant 0 : i32
    return %c0_i32, %c0_i32_0, %c0_i32_1 : i32, i32, i32
  }
  func.func @transform_2(%arg0: i32) -> (i32, i32) {
    %c0_i32 = arith.constant 0 : i32
    %c0_i32_0 = arith.constant 0 : i32
    %c0_i32_1 = arith.constant 0 : i32
    return %c0_i32, %c0_i32_0 : i32, i32
  }
  func.func @transform_3(%arg0: i32) -> (i32, i32) {
    %c0_i32 = arith.constant 0 : i32
    %c0_i32_0 = arith.constant 0 : i32
    return %arg0, %c0_i32 : i32, i32
  }
  func.func @transform_4(%arg0: i32) -> (i32, i32) {
    %c0_i32 = arith.constant 0 : i32
    %c0_i32_0 = arith.constant 0 : i32
    %c0_i32_1 = arith.constant 0 : i32
    return %c0_i32, %c0_i32_0 : i32, i32
  }
}

</mosaic_0001>

<llo_original>
// kernel: _base_double_conv.5
$region0: #{_base_double_conv.5}
  #allocation0 [shape = 'u32[]', space=smem, size = 0x4, offset = 0x4, fixed_abs, tag = 'smem constant byte address 0x4 - core index']
  #allocation1 [shape = 'u32[144,128]{1,0:T(1,128)}', space=vmem, size = 0x12000, scoped, tag = 'internal scratch']
  %s0 = inlined_call_operand.vmem [shape: f32[576,128], index: 0, kind: input, shape index: {}]
  %s1 = inlined_call_operand.vmem [shape: f32[2,128], index: 1, kind: input, shape index: {}]
  %s2 = inlined_call_operand.vmem [shape: f32[2,128], index: 2, kind: input, shape index: {}]
  %s3 = inlined_call_operand.vmem [shape: f32[576,128], index: 3, kind: output, shape index: {}]
  %s4 = sld [smem:[#allocation0]]
  $region45: #{_base_double_conv.5} parent=0
    _
  %s6 = ssub.s32 1, %s4
  %s7 = scalar_select 0, %s6, %s4
  loop: start=0, step=1, limit=6
  $region2: #{_base_double_conv.5} parent=0 // loop_pre_header
    _
  $region3: #{_base_double_conv.5} parent=0 // loop_header
    %s9 = sphi 0, %s13
    %p10 = scmp.ge.s32.totalorder %s9, 6
    %s19 = sphi 0, %s21
    %s22 = sphi 0, %s19
    %s23 = sphi 0, %s22
    %s39 = sphi 0, %s23
    %s43 = sphi 0, %s43
    %s45 = sphi 0, %s43
    %s46 = sphi 0, %s45
    %s60 = sphi 0, %s46
    %s64 = sphi 0, %s64
    %s66 = sphi 0, %s64
    %s67 = sphi 0, %s66
    %s81 = sphi 0, %s67
    %s87 = sphi 0, %s89
    %s90 = sphi 0, %s87
    %s91 = sphi 0, %s90
    %s107 = sphi 0, %s91
  $region4: #{_base_double_conv.5} parent=0 // loop_header_branch
    %12 = sbr.rel (%p10) target = $region8
  $region5: #{_base_double_conv.5} parent=0 // loop_body
    %s14 = ssub.s32 %s9, 1
    %s15 = ssub.s32 %s9, 2
    %s16 = sadd.s32 %s9, 1
    %s17 = ssub.s32 %s9, %s16
    %p18 = scmp.eq.s32.totalorder %s17, 0
    %s20 = sadd.s32 %s19, 1
    %s21 = scalar_select %p18, %s19, %s20
    %p24 = pneg %p18
    %p25 = scmp.eq.s32.totalorder %s9, 3
    %p26 = por %p24, %p25
    %p27 = scmp.ne.s32.totalorder %s19, %s22
    %p28 = scmp.eq.s32.totalorder %s9, 0
    %p29 = por %p27, %p28
    %p30 = scmp.ne.s32.totalorder %s19, %s22
    %p31 = scmp.eq.s32.totalorder %s14, 3
    %p32 = por %p30, %p31
    %p33 = scmp.ne.s32.totalorder %s22, %s23
    %p34 = scmp.eq.s32.totalorder %s14, 0
    %p35 = por %p33, %p34
    %p36 = scmp.ne.s32.totalorder %s22, %s23
    %p37 = scmp.eq.s32.totalorder %s15, 3
    %p38 = por %p36, %p37
    %p40 = scmp.ne.s32.totalorder %s23, %s39
    %p41 = scmp.eq.s32.totalorder %s15, 0
    %p42 = por %p40, %p41
    %s44 = sadd.s32 %s43, 1
    %p47 = scmp.eq.s32.totalorder %s9, 3
    %p48 = scmp.ne.s32.totalorder %s43, %s45
    %p49 = scmp.eq.s32.totalorder %s9, 0
    %p50 = por %p48, %p49
    %p51 = scmp.ne.s32.totalorder %s43, %s45
    %p52 = scmp.eq.s32.totalorder %s14, 3
    %p53 = por %p51, %p52
    %p54 = scmp.ne.s32.totalorder %s45, %s46
    %p55 = scmp.eq.s32.totalorder %s14, 0
    %p56 = por %p54, %p55
    %p57 = scmp.ne.s32.totalorder %s45, %s46
    %p58 = scmp.eq.s32.totalorder %s15, 3
    %p59 = por %p57, %p58
    %p61 = scmp.ne.s32.totalorder %s46, %s60
    %p62 = scmp.eq.s32.totalorder %s15, 0
    %p63 = por %p61, %p62
    %s65 = sadd.s32 %s64, 1
    %p68 = scmp.eq.s32.totalorder %s9, 3
    %p69 = scmp.ne.s32.totalorder %s64, %s66
    %p70 = scmp.eq.s32.totalorder %s9, 0
    %p71 = por %p69, %p70
    %p72 = scmp.ne.s32.totalorder %s64, %s66
    %p73 = scmp.eq.s32.totalorder %s14, 3
    %p74 = por %p72, %p73
    %p75 = scmp.ne.s32.totalorder %s66, %s67
    %p76 = scmp.eq.s32.totalorder %s14, 0
    %p77 = por %p75, %p76
    %p78 = scmp.ne.s32.totalorder %s66, %s67
    %p79 = scmp.eq.s32.totalorder %s15, 3
    %p80 = por %p78, %p79
    %p82 = scmp.ne.s32.totalorder %s67, %s81
    %p83 = scmp.eq.s32.totalorder %s15, 0
    %p84 = por %p82, %p83
    %s85 = ssub.s32 %s9, %s16
    %p86 = scmp.eq.s32.totalorder %s85, 0
    %s88 = sadd.s32 %s87, 1
    %s89 = scalar_select %p86, %s87, %s88
    %p92 = pneg %p86
    %p93 = scmp.eq.s32.totalorder %s9, 3
    %p94 = por %p92, %p93
    %p95 = scmp.ne.s32.totalorder %s87, %s90
    %p96 = scmp.eq.s32.totalorder %s9, 0
    %p97 = por %p95, %p96
    %p98 = scmp.ne.s32.totalorder %s87, %s90
    %p99 = scmp.eq.s32.totalorder %s14, 3
    %p100 = por %p98, %p99
    %p101 = scmp.ne.s32.totalorder %s90, %s91
    %p102 = scmp.eq.s32.totalorder %s14, 0
    %p103 = por %p101, %p102
    %p104 = scmp.ne.s32.totalorder %s90, %s91
    %p105 = scmp.eq.s32.totalorder %s15, 3
    %p106 = por %p104, %p105
    %p108 = scmp.ne.s32.totalorder %s91, %s107
    %p109 = scmp.eq.s32.totalorder %s15, 0
    %p110 = por %p108, %p109
    %p111 = scmp.le.s32.totalorder 1, %s9
    %p112 = scmp.lt.s32.totalorder %s9, 5
    %p113 = pnand %p111, %p112
    %p114 = pneg %p113
    // Predicated region
    $region9: #{_base_double_conv.5} parent=5 // pred_check
      _
    $region10: #{_base_double_conv.5} parent=5 // pred_check_branch
      %116 = sbr.rel (%p113) target = $region12
    $region11: #{_base_double_conv.5} parent=5 // pred_region
      %s117 = ssub.s32 %s9, 1
      // Predicated region
      $region13: #{_base_double_conv.5} parent=11 // pred_check
        %p118 = pneg %p56
      $region14: #{_base_double_conv.5} parent=11 // pred_check_branch
        %120 = sbr.rel (%p118) target = $region16
      $region15: #{_base_double_conv.5} parent=11 // pred_region
        _
      $region16: #{_base_double_conv.5} parent=11 // pred_fallthru
        _
      // Predicated region
      $region17: #{_base_double_conv.5} parent=11 // pred_check
        %p121 = pneg %p77
      $region18: #{_base_double_conv.5} parent=11 // pred_check_branch
        %123 = sbr.rel (%p121) target = $region20
      $region19: #{_base_double_conv.5} parent=11 // pred_region
        _
      $region20: #{_base_double_conv.5} parent=11 // pred_fallthru
        _
    $region12: #{_base_double_conv.5} parent=5 // pred_fallthru
      _
    %p124 = scmp.lt.s32.totalorder %s9, 4
    // Predicated region
    $region21: #{_base_double_conv.5} parent=5 // pred_check
      %p125 = pneg %p124
    $region22: #{_base_double_conv.5} parent=5 // pred_check_branch
      %127 = sbr.rel (%p125) target = $region24
    $region23: #{_base_double_conv.5} parent=5 // pred_region
      // Predicated region
      $region25: #{_base_double_conv.5} parent=23 // pred_check
        %p128 = pneg %p29
      $region26: #{_base_double_conv.5} parent=23 // pred_check_branch
        %130 = sbr.rel (%p128) target = $region28
      $region27: #{_base_double_conv.5} parent=23 // pred_region
        %s131 = smul.u32 18, %s9
        %p132 = scmp.lt.s32.totalorder %s131, 71
        %s133 = scalar_select %p132, %s131, 71
        %s134 = smul.addr %s133, 8
        %s135 = scalar_lea.vmem %s0, %s134
        %s136 = smul.u32 18, %s9
      $region28: #{_base_double_conv.5} parent=23 // pred_fallthru
        _
    $region24: #{_base_double_conv.5} parent=5 // pred_fallthru
      _
    %p137 = scmp.le.s32.totalorder 1, %s9
    %p138 = scmp.lt.s32.totalorder %s9, 5
    %p139 = pnand %p137, %p138
    %p140 = pneg %p139
    // Predicated region
    $region29: #{_base_double_conv.5} parent=5 // pred_check
      _
    $region30: #{_base_double_conv.5} parent=5 // pred_check_branch
      %142 = sbr.rel (%p139) target = $region32
    $region31: #{_base_double_conv.5} parent=5 // pred_region
      %s143 = ssub.s32 %s9, 1
      %s144 = smul.u32 18, %s14
      %p145 = scmp.lt.s32.totalorder %s144, 71
      %s146 = scalar_select %p145, %s144, 71
      %s147 = smul.addr %s146, 8
      %s148 = scalar_lea.vmem %s0, %s147
      %p149 = pneg %p35
      %p150 = pneg %p32
      %p151 = pneg %p56
      %p152 = pneg %p53
      %p153 = pneg %p77
      %p154 = pneg %p74
      %p155 = pneg %p103
      %p156 = pneg %p100
      %s157 = smul.u32 18, %s14
      %p158 = scmp.lt.s32.totalorder %s157, 71
      %s159 = scalar_select %p158, %s157, 71
      %s160 = smul.addr %s159, 8
      %s161 = scalar_lea.vmem %s3, %s160
      %s162 = smul.u32 18, %s14
      %p163 = scmp.lt.s32.totalorder %s162, 71
      %s164 = scalar_select %p163, %s162, 71
      %s165 = smul.addr %s164, 8
      %s166 = scalar_lea.vmem %s0, %s165
      %s167 = smul.u32 18, %s14
      %s168 = smul.u32 18, %s14
      %p169 = scmp.lt.s32.totalorder %s168, 71
      %s170 = scalar_select %p169, %s168, 71
      %s171 = smul.addr %s170, 8
      %s172 = scalar_lea.vmem %s3, %s171
      %s173 = smul.u32 18, %s14
      %v174 = vld [vmem:[%s1] sm:$0x1]
      %v175 = vmul.f32 %v174, 0.001953125
      %v176 = vld [vmem:[%s1 + $0x1] sm:$0x1]
      %v177 = vmul.f32 %v176, 0.001953125
      %v178 = vmul.f32 %v175, %v175
      %v179 = vsub.f32 %v177, %v178
      %v180 = vld [vmem:[%s2] sm:$0x1]
      %v181 = vadd.f32 %v179, 1e-05
      %v182 = vrsqrt.pop %v181
      %v183 = vmul.f32 %v180, %v182
      %v184 = vld [vmem:[%s2 + $0x1] sm:$0x1]
      %v185 = vmul.f32 %v175, %v183
      %v186 = vsub.f32 %v184, %v185
      %v187 = vld [vmem:[%s166] sm:$0xff]
      %v188 = vld [vmem:[%s166 + $0x8] sm:$0xff]
      %v189 = vld [vmem:[%s166 + $0x10] sm:$0xff]
      %v190 = vld [vmem:[%s166 + $0x18] sm:$0xff]
      %v191 = vld [vmem:[%s166 + $0x20] sm:$0xff]
      %v192 = vld [vmem:[%s166 + $0x28] sm:$0xff]
      %v193 = vld [vmem:[%s166 + $0x30] sm:$0xff]
      %v194 = vld [vmem:[%s166 + $0x38] sm:$0xff]
      %v195 = vld [vmem:[%s166 + $0x40] sm:$0xff]
      %v196 = vld [vmem:[%s166 + $0x48] sm:$0xff]
      %v197 = vld [vmem:[%s166 + $0x50] sm:$0xff]
      %v198 = vld [vmem:[%s166 + $0x58] sm:$0xff]
      %v199 = vld [vmem:[%s166 + $0x60] sm:$0xff]
      %v200 = vld [vmem:[%s166 + $0x68] sm:$0xff]
      %v201 = vld [vmem:[%s166 + $0x70] sm:$0xff]
      %v202 = vld [vmem:[%s166 + $0x78] sm:$0xff]
      %v203 = vld [vmem:[%s166 + $0x80] sm:$0xff]
      %v204 = vld [vmem:[%s166 + $0x88] sm:$0xff]
      %v205 = vlaneseq
      %v206 = vshrl.u32 %v205, 7
      %v207 = vsub.s32 0, %v206
      %v208 = vrot.slane %v183, %v207
      %v209 = vmul.f32 %v187, %v208
      %v210 = vmul.f32 %v188, %v208
      %v211 = vmul.f32 %v189, %v208
      %v212 = vmul.f32 %v190, %v208
      %v213 = vmul.f32 %v191, %v208
      %v214 = vmul.f32 %v192, %v208
      %v215 = vmul.f32 %v193, %v208
      %v216 = vmul.f32 %v194, %v208
      %v217 = vmul.f32 %v195, %v208
      %v218 = vmul.f32 %v196, %v208
      %v219 = vmul.f32 %v197, %v208
      %v220 = vmul.f32 %v198, %v208
      %v221 = vmul.f32 %v199, %v208
      %v222 = vmul.f32 %v200, %v208
      %v223 = vmul.f32 %v201, %v208
      %v224 = vmul.f32 %v202, %v208
      %v225 = vmul.f32 %v203, %v208
      %v226 = vmul.f32 %v204, %v208
      %v227 = vlaneseq
      %v228 = vshrl.u32 %v227, 7
      %v229 = vsub.s32 0, %v228
      %v230 = vrot.slane %v186, %v229
      %v231 = vadd.f32 %v209, %v230
      %v232 = vadd.f32 %v210, %v230
      %v233 = vadd.f32 %v211, %v230
      %v234 = vadd.f32 %v212, %v230
      %v235 = vadd.f32 %v213, %v230
      %v236 = vadd.f32 %v214, %v230
      %v237 = vadd.f32 %v215, %v230
      %v238 = vadd.f32 %v216, %v230
      %v239 = vadd.f32 %v217, %v230
      %v240 = vadd.f32 %v218, %v230
      %v241 = vadd.f32 %v219, %v230
      %v242 = vadd.f32 %v220, %v230
      %v243 = vadd.f32 %v221, %v230
      %v244 = vadd.f32 %v222, %v230
      %v245 = vadd.f32 %v223, %v230
      %v246 = vadd.f32 %v224, %v230
      %v247 = vadd.f32 %v225, %v230
      %v248 = vadd.f32 %v226, %v230
      %v249 = vmax.f32 %v231, 0.0
      %v250 = vmax.f32 %v232, 0.0
      %v251 = vmax.f32 %v233, 0.0
      %v252 = vmax.f32 %v234, 0.0
      %v253 = vmax.f32 %v235, 0.0
      %v254 = vmax.f32 %v236, 0.0
      %v255 = vmax.f32 %v237, 0.0
      %v256 = vmax.f32 %v238, 0.0
      %v257 = vmax.f32 %v239, 0.0
      %v258 = vmax.f32 %v240, 0.0
      %v259 = vmax.f32 %v241, 0.0
      %v260 = vmax.f32 %v242, 0.0
      %v261 = vmax.f32 %v243, 0.0
      %v262 = vmax.f32 %v244, 0.0
      %v263 = vmax.f32 %v245, 0.0
      %v264 = vmax.f32 %v246, 0.0
      %v265 = vmax.f32 %v247, 0.0
      %v266 = vmax.f32 %v248, 0.0
      %267 = vst [vmem:[%s172] sm:$0xff] %v249
      %268 = vst [vmem:[%s172 + $0x8] sm:$0xff] %v250
      %269 = vst [vmem:[%s172 + $0x10] sm:$0xff] %v251
      %270 = vst [vmem:[%s172 + $0x18] sm:$0xff] %v252
      %271 = vst [vmem:[%s172 + $0x20] sm:$0xff] %v253
      %272 = vst [vmem:[%s172 + $0x28] sm:$0xff] %v254
      %273 = vst [vmem:[%s172 + $0x30] sm:$0xff] %v255
      %274 = vst [vmem:[%s172 + $0x38] sm:$0xff] %v256
      %275 = vst [vmem:[%s172 + $0x40] sm:$0xff] %v257
      %276 = vst [vmem:[%s172 + $0x48] sm:$0xff] %v258
      %277 = vst [vmem:[%s172 + $0x50] sm:$0xff] %v259
      %278 = vst [vmem:[%s172 + $0x58] sm:$0xff] %v260
      %279 = vst [vmem:[%s172 + $0x60] sm:$0xff] %v261
      %280 = vst [vmem:[%s172 + $0x68] sm:$0xff] %v262
      %281 = vst [vmem:[%s172 + $0x70] sm:$0xff] %v263
      %282 = vst [vmem:[%s172 + $0x78] sm:$0xff] %v264
      %283 = vst [vmem:[%s172 + $0x80] sm:$0xff] %v265
      %284 = vst [vmem:[%s172 + $0x88] sm:$0xff] %v266
      %s285 = smul.u32 18, %s14
      %p286 = scmp.lt.s32.totalorder %s285, 71
      %s287 = scalar_select %p286, %s285, 71
      %s288 = smul.addr %s287, 8
      %s289 = scalar_lea.vmem %s3, %s288
      // Predicated region
      $region33: #{_base_double_conv.5} parent=31 // pred_check
        %p290 = pneg %p100
      $region34: #{_base_double_conv.5} parent=31 // pred_check_branch
        %292 = sbr.rel (%p290) target = $region36
      $region35: #{_base_double_conv.5} parent=31 // pred_region
        %s293 = smul.u32 18, %s14
      $region36: #{_base_double_conv.5} parent=31 // pred_fallthru
        _
    $region32: #{_base_double_conv.5} parent=5 // pred_fallthru
      _
    %p294 = scmp.le.s32.totalorder 2, %s9
    // Predicated region
    $region37: #{_base_double_conv.5} parent=5 // pred_check
      %p295 = pneg %p294
    $region38: #{_base_double_conv.5} parent=5 // pred_check_branch
      %297 = sbr.rel (%p295) target = $region40
    $region39: #{_base_double_conv.5} parent=5 // pred_region
      %s298 = ssub.s32 %s9, 2
      // Predicated region
      $region41: #{_base_double_conv.5} parent=39 // pred_check
        %p299 = pneg %p106
      $region42: #{_base_double_conv.5} parent=39 // pred_check_branch
        %301 = sbr.rel (%p299) target = $region44
      $region43: #{_base_double_conv.5} parent=39 // pred_region
        %s302 = smul.u32 18, %s15
        %p303 = scmp.lt.s32.totalorder %s302, 71
        %s304 = scalar_select %p303, %s302, 71
        %s305 = smul.addr %s304, 8
        %s306 = scalar_lea.vmem %s3, %s305
      $region44: #{_base_double_conv.5} parent=39 // pred_fallthru
        _
    $region40: #{_base_double_conv.5} parent=5 // pred_fallthru
      _
  $region6: #{_base_double_conv.5} parent=0 // loop_footer
    %s13 = sadd.s32 1, %s9
  $region7: #{_base_double_conv.5} parent=0 // loop_footer_branch
    %8 = sbr.rel target = $region3
  $region8: #{_base_double_conv.5} parent=0 // loop_exit
    _

// kernel: _base_double_conv.4
$region0: #{_base_double_conv.4}
  #allocation0 [shape = 'u32[]', space=smem, size = 0x4, offset = 0x4, fixed_abs, tag = 'smem constant byte address 0x4 - core index']
  #allocation1 [shape = 'u32[144,128]{1,0:T(1,128)}', space=vmem, size = 0x12000, scoped, tag = 'internal scratch']
  %s0 = inlined_call_operand.vmem [shape: f32[576,12], index: 0, kind: input, shape index: {}]
  %s1 = inlined_call_operand.vmem [shape: f32[3,12,128], index: 1, kind: input, shape index: {}]
  %s2 = inlined_call_operand.vmem [shape: f32[144,1], index: 2, kind: input, shape index: {}]
  %s3 = inlined_call_operand.vmem [shape: f32[576,128], index: 3, kind: output, shape index: {0}]
  %s4 = inlined_call_operand.vmem [shape: f32[2,128], index: 4, kind: output, shape index: {1}]
  %5 = xla_tuple %s3, %s4
  %s6 = sld [smem:[#allocation0]]
  $region57: #{_base_double_conv.4} parent=0
    _
  %s8 = ssub.s32 1, %s6
  %s9 = scalar_select 0, %s8, %s6
  loop: start=0, step=1, limit=6
  $region2: #{_base_double_conv.4} parent=0 // loop_pre_header
    _
  $region3: #{_base_double_conv.4} parent=0 // loop_header
    %s11 = sphi 0, %s15
    %p12 = scmp.ge.s32.totalorder %s11, 6
    %s21 = sphi 0, %s23
    %s24 = sphi 0, %s21
    %s25 = sphi 0, %s24
    %s41 = sphi 0, %s25
    %s45 = sphi 0, %s45
    %s47 = sphi 0, %s45
    %s48 = sphi 0, %s47
    %s62 = sphi 0, %s48
    %s66 = sphi 0, %s66
    %s68 = sphi 0, %s66
    %s69 = sphi 0, %s68
    %s83 = sphi 0, %s69
    %s89 = sphi 0, %s91
    %s92 = sphi 0, %s89
    %s93 = sphi 0, %s92
    %s109 = sphi 0, %s93
    %s113 = sphi 0, %s113
    %s115 = sphi 0, %s113
    %s116 = sphi 0, %s115
    %s130 = sphi 0, %s116
  $region4: #{_base_double_conv.4} parent=0 // loop_header_branch
    %14 = sbr.rel (%p12) target = $region8
  $region5: #{_base_double_conv.4} parent=0 // loop_body
    %s16 = ssub.s32 %s11, 1
    %s17 = ssub.s32 %s11, 2
    %s18 = sadd.s32 %s11, 1
    %s19 = ssub.s32 %s11, %s18
    %p20 = scmp.eq.s32.totalorder %s19, 0
    %s22 = sadd.s32 %s21, 1
    %s23 = scalar_select %p20, %s21, %s22
    %p26 = pneg %p20
    %p27 = scmp.eq.s32.totalorder %s11, 3
    %p28 = por %p26, %p27
    %p29 = scmp.ne.s32.totalorder %s21, %s24
    %p30 = scmp.eq.s32.totalorder %s11, 0
    %p31 = por %p29, %p30
    %p32 = scmp.ne.s32.totalorder %s21, %s24
    %p33 = scmp.eq.s32.totalorder %s16, 3
    %p34 = por %p32, %p33
    %p35 = scmp.ne.s32.totalorder %s24, %s25
    %p36 = scmp.eq.s32.totalorder %s16, 0
    %p37 = por %p35, %p36
    %p38 = scmp.ne.s32.totalorder %s24, %s25
    %p39 = scmp.eq.s32.totalorder %s17, 3
    %p40 = por %p38, %p39
    %p42 = scmp.ne.s32.totalorder %s25, %s41
    %p43 = scmp.eq.s32.totalorder %s17, 0
    %p44 = por %p42, %p43
    %s46 = sadd.s32 %s45, 1
    %p49 = scmp.eq.s32.totalorder %s11, 3
    %p50 = scmp.ne.s32.totalorder %s45, %s47
    %p51 = scmp.eq.s32.totalorder %s11, 0
    %p52 = por %p50, %p51
    %p53 = scmp.ne.s32.totalorder %s45, %s47
    %p54 = scmp.eq.s32.totalorder %s16, 3
    %p55 = por %p53, %p54
    %p56 = scmp.ne.s32.totalorder %s47, %s48
    %p57 = scmp.eq.s32.totalorder %s16, 0
    %p58 = por %p56, %p57
    %p59 = scmp.ne.s32.totalorder %s47, %s48
    %p60 = scmp.eq.s32.totalorder %s17, 3
    %p61 = por %p59, %p60
    %p63 = scmp.ne.s32.totalorder %s48, %s62
    %p64 = scmp.eq.s32.totalorder %s17, 0
    %p65 = por %p63, %p64
    %s67 = sadd.s32 %s66, 1
    %p70 = scmp.eq.s32.totalorder %s11, 3
    %p71 = scmp.ne.s32.totalorder %s66, %s68
    %p72 = scmp.eq.s32.totalorder %s11, 0
    %p73 = por %p71, %p72
    %p74 = scmp.ne.s32.totalorder %s66, %s68
    %p75 = scmp.eq.s32.totalorder %s16, 3
    %p76 = por %p74, %p75
    %p77 = scmp.ne.s32.totalorder %s68, %s69
    %p78 = scmp.eq.s32.totalorder %s16, 0
    %p79 = por %p77, %p78
    %p80 = scmp.ne.s32.totalorder %s68, %s69
    %p81 = scmp.eq.s32.totalorder %s17, 3
    %p82 = por %p80, %p81
    %p84 = scmp.ne.s32.totalorder %s69, %s83
    %p85 = scmp.eq.s32.totalorder %s17, 0
    %p86 = por %p84, %p85
    %s87 = ssub.s32 %s11, %s18
    %p88 = scmp.eq.s32.totalorder %s87, 0
    %s90 = sadd.s32 %s89, 1
    %s91 = scalar_select %p88, %s89, %s90
    %p94 = pneg %p88
    %p95 = scmp.eq.s32.totalorder %s11, 3
    %p96 = por %p94, %p95
    %p97 = scmp.ne.s32.totalorder %s89, %s92
    %p98 = scmp.eq.s32.totalorder %s11, 0
    %p99 = por %p97, %p98
    %p100 = scmp.ne.s32.totalorder %s89, %s92
    %p101 = scmp.eq.s32.totalorder %s16, 3
    %p102 = por %p100, %p101
    %p103 = scmp.ne.s32.totalorder %s92, %s93
    %p104 = scmp.eq.s32.totalorder %s16, 0
    %p105 = por %p103, %p104
    %p106 = scmp.ne.s32.totalorder %s92, %s93
    %p107 = scmp.eq.s32.totalorder %s17, 3
    %p108 = por %p106, %p107
    %p110 = scmp.ne.s32.totalorder %s93, %s109
    %p111 = scmp.eq.s32.totalorder %s17, 0
    %p112 = por %p110, %p111
    %s114 = sadd.s32 %s113, 1
    %p117 = scmp.eq.s32.totalorder %s11, 3
    %p118 = scmp.ne.s32.totalorder %s113, %s115
    %p119 = scmp.eq.s32.totalorder %s11, 0
    %p120 = por %p118, %p119
    %p121 = scmp.ne.s32.totalorder %s113, %s115
    %p122 = scmp.eq.s32.totalorder %s16, 3
    %p123 = por %p121, %p122
    %p124 = scmp.ne.s32.totalorder %s115, %s116
    %p125 = scmp.eq.s32.totalorder %s16, 0
    %p126 = por %p124, %p125
    %p127 = scmp.ne.s32.totalorder %s115, %s116
    %p128 = scmp.eq.s32.totalorder %s17, 3
    %p129 = por %p127, %p128
    %p131 = scmp.ne.s32.totalorder %s116, %s130
    %p132 = scmp.eq.s32.totalorder %s17, 0
    %p133 = por %p131, %p132
    %p134 = scmp.le.s32.totalorder 1, %s11
    %p135 = scmp.lt.s32.totalorder %s11, 5
    %p136 = pnand %p134, %p135
    %p137 = pneg %p136
    // Predicated region
    $region9: #{_base_double_conv.4} parent=5 // pred_check
      _
    $region10: #{_base_double_conv.4} parent=5 // pred_check_branch
      %139 = sbr.rel (%p136) target = $region12
    $region11: #{_base_double_conv.4} parent=5 // pred_region
      %s140 = ssub.s32 %s11, 1
      // Predicated region
      $region13: #{_base_double_conv.4} parent=11 // pred_check
        %p141 = pneg %p58
      $region14: #{_base_double_conv.4} parent=11 // pred_check_branch
        %143 = sbr.rel (%p141) target = $region16
      $region15: #{_base_double_conv.4} parent=11 // pred_region
        _
      $region16: #{_base_double_conv.4} parent=11 // pred_fallthru
        _
      // Predicated region
      $region17: #{_base_double_conv.4} parent=11 // pred_check
        %p144 = pneg %p79
      $region18: #{_base_double_conv.4} parent=11 // pred_check_branch
        %146 = sbr.rel (%p144) target = $region20
      $region19: #{_base_double_conv.4} parent=11 // pred_region
        _
      $region20: #{_base_double_conv.4} parent=11 // pred_fallthru
        _
    $region12: #{_base_double_conv.4} parent=5 // pred_fallthru
      _
    %p147 = scmp.lt.s32.totalorder %s11, 4
    // Predicated region
    $region21: #{_base_double_conv.4} parent=5 // pred_check
      %p148 = pneg %p147
    $region22: #{_base_double_conv.4} parent=5 // pred_check_branch
      %150 = sbr.rel (%p148) target = $region24
    $region23: #{_base_double_conv.4} parent=5 // pred_region
      // Predicated region
      $region25: #{_base_double_conv.4} parent=23 // pred_check
        %p151 = pneg %p31
      $region26: #{_base_double_conv.4} parent=23 // pred_check_branch
        %153 = sbr.rel (%p151) target = $region28
      $region27: #{_base_double_conv.4} parent=23 // pred_region
        %s154 = smul.u32 18, %s11
        %p155 = scmp.lt.s32.totalorder %s154, 71
        %s156 = scalar_select %p155, %s154, 71
        %s157 = smul.addr %s156, 8
        %s158 = scalar_lea.vmem %s0, %s157
        %s159 = smul.u32 18, %s11
      $region28: #{_base_double_conv.4} parent=23 // pred_fallthru
        _
    $region24: #{_base_double_conv.4} parent=5 // pred_fallthru
      _
    %p160 = scmp.le.s32.totalorder 1, %s11
    %p161 = scmp.lt.s32.totalorder %s11, 5
    %p162 = pnand %p160, %p161
    %p163 = pneg %p162
    // Predicated region
    $region29: #{_base_double_conv.4} parent=5 // pred_check
      _
    $region30: #{_base_double_conv.4} parent=5 // pred_check_branch
      %165 = sbr.rel (%p162) target = $region32
    $region31: #{_base_double_conv.4} parent=5 // pred_region
      %s166 = ssub.s32 %s11, 1
      %s167 = smul.u32 18, %s16
      %p168 = scmp.lt.s32.totalorder %s167, 71
      %s169 = scalar_select %p168, %s167, 71
      %s170 = smul.addr %s169, 8
      %s171 = scalar_lea.vmem %s0, %s170
      %p172 = pneg %p37
      %p173 = pneg %p34
      %p174 = pneg %p58
      %p175 = pneg %p55
      %p176 = pneg %p79
      %p177 = pneg %p76
      %p178 = pneg %p105
      %p179 = pneg %p102
      %s180 = smul.u32 18, %s16
      %p181 = scmp.lt.s32.totalorder %s180, 71
      %s182 = scalar_select %p181, %s180, 71
      %s183 = smul.addr %s182, 8
      %s184 = scalar_lea.vmem %s3, %s183
      %p185 = pneg %p126
      %p186 = pneg %p123
      %s187 = smul.u32 18, %s16
      %p188 = scmp.lt.s32.totalorder %s187, 71
      %s189 = scalar_select %p188, %s187, 71
      %s190 = smul.addr %s189, 8
      %s191 = scalar_lea.vmem %s0, %s190
      %s192 = smul.u32 18, %s16
      %s193 = smul.u32 18, %s16
      %p194 = scmp.lt.s32.totalorder %s193, 71
      %s195 = scalar_select %p194, %s193, 71
      %s196 = smul.addr %s195, 8
      %s197 = scalar_lea.vmem %s3, %s196
      %s198 = smul.u32 18, %s16
      %v199 = vld [vmem:[%s191] sm:$0xff]
      %v200 = vld [vmem:[%s191 + $0x8] sm:$0xff]
      %v201 = vld [vmem:[%s191 + $0x10] sm:$0xff]
      %v202 = vld [vmem:[%s191 + $0x18] sm:$0xff]
      %v203 = vld [vmem:[%s191 + $0x20] sm:$0xff]
      %v204 = vld [vmem:[%s191 + $0x28] sm:$0xff]
      %v205 = vld [vmem:[%s191 + $0x30] sm:$0xff]
      %v206 = vld [vmem:[%s191 + $0x38] sm:$0xff]
      %v207 = vld [vmem:[%s191 + $0x40] sm:$0xff]
      %v208 = vld [vmem:[%s191 + $0x48] sm:$0xff]
      %v209 = vld [vmem:[%s191 + $0x50] sm:$0xff]
      %v210 = vld [vmem:[%s191 + $0x58] sm:$0xff]
      %v211 = vld [vmem:[%s191 + $0x60] sm:$0xff]
      %v212 = vld [vmem:[%s191 + $0x68] sm:$0xff]
      %v213 = vld [vmem:[%s191 + $0x70] sm:$0xff]
      %v214 = vld [vmem:[%s191 + $0x78] sm:$0xff]
      %v215 = vld [vmem:[%s191 + $0x80] sm:$0xff]
      %v216 = vld [vmem:[%s191 + $0x88] sm:$0x3f]
      %v217 = vld [vmem:[%s1] sm:$0xff]
      %v218 = vld [vmem:[%s1 + $0x8] sm:$0xf]
      %v219 = vld [vmem:[%s191 + $0x1] sm:$0xff]
      %v220 = vld [vmem:[%s191 + $0x9] sm:$0xff]
      %v221 = vld [vmem:[%s191 + $0x11] sm:$0xff]
      %v222 = vld [vmem:[%s191 + $0x19] sm:$0xff]
      %v223 = vld [vmem:[%s191 + $0x21] sm:$0xff]
      %v224 = vld [vmem:[%s191 + $0x29] sm:$0xff]
      %v225 = vld [vmem:[%s191 + $0x31] sm:$0xff]
      %v226 = vld [vmem:[%s191 + $0x39] sm:$0xff]
      %v227 = vld [vmem:[%s191 + $0x41] sm:$0xff]
      %v228 = vld [vmem:[%s191 + $0x49] sm:$0xff]
      %v229 = vld [vmem:[%s191 + $0x51] sm:$0xff]
      %v230 = vld [vmem:[%s191 + $0x59] sm:$0xff]
      %v231 = vld [vmem:[%s191 + $0x61] sm:$0xff]
      %v232 = vld [vmem:[%s191 + $0x69] sm:$0xff]
      %v233 = vld [vmem:[%s191 + $0x71] sm:$0xff]
      %v234 = vld [vmem:[%s191 + $0x79] sm:$0xff]
      %v235 = vld [vmem:[%s191 + $0x81] sm:$0xff]
      %v236 = vld [vmem:[%s191 + $0x89] sm:$0x3f]
      %s237 = scalar_lea.vmem %s1, 16
      %v238 = vld [vmem:[%s237] sm:$0xff]
      %v239 = vld [vmem:[%s237 + $0x8] sm:$0xf]
      %vm240 = vcmask 97280
      %v242 = vsel %vm240, %v219, 0
      %v245 = vsel %vm240, %v220, 0
      %v248 = vsel %vm240, %v221, 0
      %v251 = vsel %vm240, %v222, 0
      %v254 = vsel %vm240, %v223, 0
      %v257 = vsel %vm240, %v224, 0
      %v260 = vsel %vm240, %v225, 0
      %v263 = vsel %vm240, %v226, 0
      %v266 = vsel %vm240, %v227, 0
      %v269 = vsel %vm240, %v228, 0
      %v272 = vsel %vm240, %v229, 0
      %v275 = vsel %vm240, %v230, 0
      %v278 = vsel %vm240, %v231, 0
      %v281 = vsel %vm240, %v232, 0
      %v284 = vsel %vm240, %v233, 0
      %v287 = vsel %vm240, %v234, 0
      %v290 = vsel %vm240, %v235, 0
      %v293 = vsel %vm240, %v236, 0
      %vm295 = vcmask 1043456
      %v297 = vsel %vm295, %v239, 0
      %299 = vmatprep.subr.mxu0 0.0
      %300 = vmatpush1.msra.mxu0 %v238
      %301 = vmatprep.subr.mxu0 0.0
      %302 = vmatpush1.msra.mxu0 %v297
      %303 = vmatprep.subr.mxu0 0.0
      %304 = vmatpush1.msra.mxu0 0.0
      %305 = vmatprep.subr.mxu0 0.0
      %306 = vmatpush1.msra.mxu0 0.0
      %307 = vmatprep.subr.mxu0 0.0
      %308 = vmatpush1.msra.mxu0 0.0
      %309 = vmatprep.subr.mxu0 0.0
      %310 = vmatpush1.msra.mxu0 0.0
      %311 = vmatprep.subr.mxu0 0.0
      %312 = vmatpush1.msra.mxu0 0.0
      %313 = vmatprep.subr.mxu0 0.0
      %314 = vmatpush1.msra.mxu0 0.0
      %315 = vmatprep.subr.mxu0 0.0
      %316 = vmatpush1.msra.mxu0 0.0
      %317 = vmatprep.subr.mxu0 0.0
      %318 = vmatpush1.msra.mxu0 0.0
      %319 = vmatprep.subr.mxu0 0.0
      %320 = vmatpush1.msra.mxu0 0.0
      %321 = vmatprep.subr.mxu0 0.0
      %322 = vmatpush1.msra.mxu0 0.0
      %323 = vmatprep.subr.mxu0 0.0
      %324 = vmatpush1.msra.mxu0 0.0
      %325 = vmatprep.subr.mxu0 0.0
      %326 = vmatpush1.msra.mxu0 0.0
      %327 = vmatprep.subr.mxu0 0.0
      %328 = vmatpush1.msra.mxu0 0.0
      %329 = vmatprep.subr.mxu0 0.0
      %330 = vmatpush1.msra.mxu0 0.0
      %331 = vmatprep.subr.mxu0 0.0
      %332 = vmatpush1.msra.mxu0 0.0
      %333 = vmatprep.subr.mxu0 0.0
      %334 = vmatpush1.msra.mxu0 0.0
      %335 = vmatprep.subr.mxu0 0.0
      %336 = vmatpush1.msra.mxu0 0.0
      %337 = vmatprep.subr.mxu0 0.0
      %338 = vmatpush1.msra.mxu0 0.0
      %339 = vmatprep.subr.mxu0 0.0
      %340 = vmatpush1.msra.mxu0 0.0
      %341 = vmatprep.subr.mxu0 0.0
      %342 = vmatpush1.msra.mxu0 0.0
      %343 = vmatprep.subr.mxu0 0.0
      %344 = vmatpush1.msra.mxu0 0.0
      %345 = vmatprep.subr.mxu0 0.0
      %346 = vmatpush1.msra.mxu0 0.0
      %347 = vmatprep.subr.mxu0 0.0
      %348 = vmatpush1.msra.mxu0 0.0
      %349 = vmatprep.subr.mxu0 0.0
      %350 = vmatpush1.msra.mxu0 0.0
      %351 = vmatprep.subr.mxu0 0.0
      %352 = vmatpush1.msra.mxu0 0.0
      %353 = vmatprep.subr.mxu0 0.0
      %354 = vmatpush1.msra.mxu0 0.0
      %355 = vmatprep.subr.mxu0 0.0
      %356 = vmatpush1.msra.mxu0 0.0
      %357 = vmatprep.subr.mxu0 0.0
      %358 = vmatpush1.msra.mxu0 0.0
      %359 = vmatprep.subr.mxu0 0.0
      %360 = vmatpush1.msra.mxu0 0.0
      %361 = vmatprep.subr.mxu0 0.0
      %362 = vmatpush1.msra.mxu0 0.0
      %363 = vmatprep.mubr.f32.mxu0 0.0
      %364 = vmatmul.mubr.f32.gmra.mrb[0].mxu0 %v242
      %v365 = vpop.f32.mrb[0].mxu0
      %v366 = vadd.f32 0.0, %v365
      %v367 = vpop.f32.mrb[0].mxu0
      %368 = vmatprep.mubr.f32.mxu0 0.0
      %369 = vmatmul.mubr.f32.gmra.mrb[0].mxu0 %v245
      %v370 = vpop.f32.mrb[0].mxu0
      %v371 = vadd.f32 0.0, %v370
      %v372 = vpop.f32.mrb[0].mxu0
      %373 = vmatprep.mubr.f32.mxu0 0.0
      %374 = vmatmul.mubr.f32.gmra.mrb[0].mxu0 %v248
      %v375 = vpop.f32.mrb[0].mxu0
      %v376 = vadd.f32 0.0, %v375
      %v377 = vpop.f32.mrb[0].mxu0
      %378 = vmatprep.mubr.f32.mxu0 0.0
      %379 = vmatmul.mubr.f32.gmra.mrb[0].mxu0 %v251
      %v380 = vpop.f32.mrb[0].mxu0
      %v381 = vadd.f32 0.0, %v380
      %v382 = vpop.f32.mrb[0].mxu0
      %383 = vmatprep.mubr.f32.mxu0 0.0
      %384 = vmatmul.mubr.f32.gmra.mrb[0].mxu0 %v254
      %v385 = vpop.f32.mrb[0].mxu0
      %v386 = vadd.f32 0.0, %v385
      %v387 = vpop.f32.mrb[0].mxu0
      %388 = vmatprep.mubr.f32.mxu0 0.0
      %389 = vmatmul.mubr.f32.gmra.mrb[0].mxu0 %v257
      %v390 = vpop.f32.mrb[0].mxu0
      %v391 = vadd.f32 0.0, %v390
      %v392 = vpop.f32.mrb[0].mxu0
      %393 = vmatprep.mubr.f32.mxu0 0.0
      %394 = vmatmul.mubr.f32.gmra.mrb[0].mxu0 %v260
      %v395 = vpop.f32.mrb[0].mxu0
      %v396 = vadd.f32 0.0, %v395
      %v397 = vpop.f32.mrb[0].mxu0
      %398 = vmatprep.mubr.f32.mxu0 0.0
      %399 = vmatmul.mubr.f32.gmra.mrb[0].mxu0 %v263
      %v400 = vpop.f32.mrb[0].mxu0
      %v401 = vadd.f32 0.0, %v400
      %v402 = vpop.f32.mrb[0].mxu0
      %403 = vmatprep.mubr.f32.mxu0 0.0
      %404 = vmatmul.mubr.f32.gmra.mrb[0].mxu0 %v266
      %v405 = vpop.f32.mrb[0].mxu0
      %v406 = vadd.f32 0.0, %v405
      %v407 = vpop.f32.mrb[0].mxu0
      %408 = vmatprep.mubr.f32.mxu0 0.0
      %409 = vmatmul.mubr.f32.gmra.mrb[0].mxu0 %v269
      %v410 = vpop.f32.mrb[0].mxu0
      %v411 = vadd.f32 0.0, %v410
      %v412 = vpop.f32.mrb[0].mxu0
      %413 = vmatprep.mubr.f32.mxu0 0.0
      %414 = vmatmul.mubr.f32.gmra.mrb[0].mxu0 %v272
      %v415 = vpop.f32.mrb[0].mxu0
      %v416 = vadd.f32 0.0, %v415
      %v417 = vpop.f32.mrb[0].mxu0
      %418 = vmatprep.mubr.f32.mxu0 0.0
      %419 = vmatmul.mubr.f32.gmra.mrb[0].mxu0 %v275
      %v420 = vpop.f32.mrb[0].mxu0
      %v421 = vadd.f32 0.0, %v420
      %v422 = vpop.f32.mrb[0].mxu0
      %423 = vmatprep.mubr.f32.mxu0 0.0
      %424 = vmatmul.mubr.f32.gmra.mrb[0].mxu0 %v278
      %v425 = vpop.f32.mrb[0].mxu0
      %v426 = vadd.f32 0.0, %v425
      %v427 = vpop.f32.mrb[0].mxu0
      %428 = vmatprep.mubr.f32.mxu0 0.0
      %429 = vmatmul.mubr.f32.gmra.mrb[0].mxu0 %v281
      %v430 = vpop.f32.mrb[0].mxu0
      %v431 = vadd.f32 0.0, %v430
      %v432 = vpop.f32.mrb[0].mxu0
      %433 = vmatprep.mubr.f32.mxu0 0.0
      %434 = vmatmul.mubr.f32.gmra.mrb[0].mxu0 %v284
      %v435 = vpop.f32.mrb[0].mxu0
      %v436 = vadd.f32 0.0, %v435
      %v437 = vpop.f32.mrb[0].mxu0
      %438 = vmatprep.mubr.f32.mxu0 0.0
      %439 = vmatmul.mubr.f32.gmra.mrb[0].mxu0 %v287
      %v440 = vpop.f32.mrb[0].mxu0
      %v441 = vadd.f32 0.0, %v440
      %v442 = vpop.f32.mrb[0].mxu0
      %443 = vmatprep.mubr.f32.mxu0 0.0
      %444 = vmatmul.mubr.f32.gmra.mrb[0].mxu0 %v290
      %v445 = vpop.f32.mrb[0].mxu0
      %v446 = vadd.f32 0.0, %v445
      %v447 = vpop.f32.mrb[0].mxu0
      %448 = vmatprep.mubr.f32.mxu0 0.0
      %449 = vmatmul.mubr.f32.gmra.mrb[0].mxu0 %v293
      %v450 = vpop.f32.mrb[0].mxu0
      %v451 = vadd.f32 0.0, %v450
      %v452 = vpop.f32.mrb[0].mxu0
      %453 = vdwg.mxu0
      %v455 = vsel %vm240, %v199, 0
      %v458 = vsel %vm240, %v200, 0
      %v461 = vsel %vm240, %v201, 0
      %v464 = vsel %vm240, %v202, 0
      %v467 = vsel %vm240, %v203, 0
      %v470 = vsel %vm240, %v204, 0
      %v473 = vsel %vm240, %v205, 0
      %v476 = vsel %vm240, %v206, 0
      %v479 = vsel %vm240, %v207, 0
      %v482 = vsel %vm240, %v208, 0
      %v485 = vsel %vm240, %v209, 0
      %v488 = vsel %vm240, %v210, 0
      %v491 = vsel %vm240, %v211, 0
      %v494 = vsel %vm240, %v212, 0
      %v497 = vsel %vm240, %v213, 0
      %v500 = vsel %vm240, %v214, 0
      %v503 = vsel %vm240, %v215, 0
      %v506 = vsel %vm240, %v216, 0
      %v509 = vsel %vm295, %v218, 0
      %511 = vmatprep.subr.mxu0 0.0
      %512 = vmatpush1.msra.mxu0 %v217
      %513 = vmatprep.subr.mxu0 0.0
      %514 = vmatpush1.msra.mxu0 %v509
      %515 = vmatprep.subr.mxu0 0.0
      %516 = vmatpush1.msra.mxu0 0.0
      %517 = vmatprep.subr.mxu0 0.0
      %518 = vmatpush1.msra.mxu0 0.0
      %519 = vmatprep.subr.mxu0 0.0
      %520 = vmatpush1.msra.mxu0 0.0
      %521 = vmatprep.subr.mxu0 0.0
      %522 = vmatpush1.msra.mxu0 0.0
      %523 = vmatprep.subr.mxu0 0.0
      %524 = vmatpush1.msra.mxu0 0.0
      %525 = vmatprep.subr.mxu0 0.0
      %526 = vmatpush1.msra.mxu0 0.0
      %527 = vmatprep.subr.mxu0 0.0
      %528 = vmatpush1.msra.mxu0 0.0
      %529 = vmatprep.subr.mxu0 0.0
      %530 = vmatpush1.msra.mxu0 0.0
      %531 = vmatprep.subr.mxu0 0.0
      %532 = vmatpush1.msra.mxu0 0.0
      %533 = vmatprep.subr.mxu0 0.0
      %534 = vmatpush1.msra.mxu0 0.0
      %535 = vmatprep.subr.mxu0 0.0
      %536 = vmatpush1.msra.mxu0 0.0
      %537 = vmatprep.subr.mxu0 0.0
      %538 = vmatpush1.msra.mxu0 0.0
      %539 = vmatprep.subr.mxu0 0.0
      %540 = vmatpush1.msra.mxu0 0.0
      %541 = vmatprep.subr.mxu0 0.0
      %542 = vmatpush1.msra.mxu0 0.0
      %543 = vmatprep.subr.mxu0 0.0
      %544 = vmatpush1.msra.mxu0 0.0
      %545 = vmatprep.subr.mxu0 0.0
      %546 = vmatpush1.msra.mxu0 0.0
      %547 = vmatprep.subr.mxu0 0.0
      %548 = vmatpush1.msra.mxu0 0.0
      %549 = vmatprep.subr.mxu0 0.0
      %550 = vmatpush1.msra.mxu0 0.0
      %551 = vmatprep.subr.mxu0 0.0
      %552 = vmatpush1.msra.mxu0 0.0
      %553 = vmatprep.subr.mxu0 0.0
      %554 = vmatpush1.msra.mxu0 0.0
      %555 = vmatprep.subr.mxu0 0.0
      %556 = vmatpush1.msra.mxu0 0.0
      %557 = vmatprep.subr.mxu0 0.0
      %558 = vmatpush1.msra.mxu0 0.0
      %559 = vmatprep.subr.mxu0 0.0
      %560 = vmatpush1.msra.mxu0 0.0
      %561 = vmatprep.subr.mxu0 0.0
      %562 = vmatpush1.msra.mxu0 0.0
      %563 = vmatprep.subr.mxu0 0.0
      %564 = vmatpush1.msra.mxu0 0.0
      %565 = vmatprep.subr.mxu0 0.0
      %566 = vmatpush1.msra.mxu0 0.0
      %567 = vmatprep.subr.mxu0 0.0
      %568 = vmatpush1.msra.mxu0 0.0
      %569 = vmatprep.subr.mxu0 0.0
      %570 = vmatpush1.msra.mxu0 0.0
      %571 = vmatprep.subr.mxu0 0.0
      %572 = vmatpush1.msra.mxu0 0.0
      %573 = vmatprep.subr.mxu0 0.0
      %574 = vmatpush1.msra.mxu0 0.0
      %575 = vmatprep.mubr.f32.mxu0 0.0
      %576 = vmatmul.mubr.f32.gmra.mrb[0].mxu0 %v455
      %v577 = vpop.f32.mrb[0].mxu0
      %v578 = vadd.f32 %v366, %v577
      %v579 = vpop.f32.mrb[0].mxu0
      %580 = vmatprep.mubr.f32.mxu0 0.0
      %581 = vmatmul.mubr.f32.gmra.mrb[0].mxu0 %v458
      %v582 = vpop.f32.mrb[0].mxu0
      %v583 = vadd.f32 %v371, %v582
      %v584 = vpop.f32.mrb[0].mxu0
      %585 = vmatprep.mubr.f32.mxu0 0.0
      %586 = vmatmul.mubr.f32.gmra.mrb[0].mxu0 %v461
      %v587 = vpop.f32.mrb[0].mxu0
      %v588 = vadd.f32 %v376, %v587
      %v589 = vpop.f32.mrb[0].mxu0
      %590 = vmatprep.mubr.f32.mxu0 0.0
      %591 = vmatmul.mubr.f32.gmra.mrb[0].mxu0 %v464
      %v592 = vpop.f32.mrb[0].mxu0
      %v593 = vadd.f32 %v381, %v592
      %v594 = vpop.f32.mrb[0].mxu0
      %595 = vmatprep.mubr.f32.mxu0 0.0
      %596 = vmatmul.mubr.f32.gmra.mrb[0].mxu0 %v467
      %v597 = vpop.f32.mrb[0].mxu0
      %v598 = vadd.f32 %v386, %v597
      %v599 = vpop.f32.mrb[0].mxu0
      %600 = vmatprep.mubr.f32.mxu0 0.0
      %601 = vmatmul.mubr.f32.gmra.mrb[0].mxu0 %v470
      %v602 = vpop.f32.mrb[0].mxu0
      %v603 = vadd.f32 %v391, %v602
      %v604 = vpop.f32.mrb[0].mxu0
      %605 = vmatprep.mubr.f32.mxu0 0.0
      %606 = vmatmul.mubr.f32.gmra.mrb[0].mxu0 %v473
      %v607 = vpop.f32.mrb[0].mxu0
      %v608 = vadd.f32 %v396, %v607
      %v609 = vpop.f32.mrb[0].mxu0
      %610 = vmatprep.mubr.f32.mxu0 0.0
      %611 = vmatmul.mubr.f32.gmra.mrb[0].mxu0 %v476
      %v612 = vpop.f32.mrb[0].mxu0
      %v613 = vadd.f32 %v401, %v612
      %v614 = vpop.f32.mrb[0].mxu0
      %615 = vmatprep.mubr.f32.mxu0 0.0
      %616 = vmatmul.mubr.f32.gmra.mrb[0].mxu0 %v479
      %v617 = vpop.f32.mrb[0].mxu0
      %v618 = vadd.f32 %v406, %v617
      %v619 = vpop.f32.mrb[0].mxu0
      %620 = vmatprep.mubr.f32.mxu0 0.0
      %621 = vmatmul.mubr.f32.gmra.mrb[0].mxu0 %v482
      %v622 = vpop.f32.mrb[0].mxu0
      %v623 = vadd.f32 %v411, %v622
      %v624 = vpop.f32.mrb[0].mxu0
      %625 = vmatprep.mubr.f32.mxu0 0.0
      %626 = vmatmul.mubr.f32.gmra.mrb[0].mxu0 %v485
      %v627 = vpop.f32.mrb[0].mxu0
      %v628 = vadd.f32 %v416, %v627
      %v629 = vpop.f32.mrb[0].mxu0
      %630 = vmatprep.mubr.f32.mxu0 0.0
      %631 = vmatmul.mubr.f32.gmra.mrb[0].mxu0 %v488
      %v632 = vpop.f32.mrb[0].mxu0
      %v633 = vadd.f32 %v421, %v632
      %v634 = vpop.f32.mrb[0].mxu0
      %635 = vmatprep.mubr.f32.mxu0 0.0
      %636 = vmatmul.mubr.f32.gmra.mrb[0].mxu0 %v491
      %v637 = vpop.f32.mrb[0].mxu0
      %v638 = vadd.f32 %v426, %v637
      %v639 = vpop.f32.mrb[0].mxu0
      %640 = vmatprep.mubr.f32.mxu0 0.0
      %641 = vmatmul.mubr.f32.gmra.mrb[0].mxu0 %v494
      %v642 = vpop.f32.mrb[0].mxu0
      %v643 = vadd.f32 %v431, %v642
      %v644 = vpop.f32.mrb[0].mxu0
      %645 = vmatprep.mubr.f32.mxu0 0.0
      %646 = vmatmul.mubr.f32.gmra.mrb[0].mxu0 %v497
      %v647 = vpop.f32.mrb[0].mxu0
      %v648 = vadd.f32 %v436, %v647
      %v649 = vpop.f32.mrb[0].mxu0
      %650 = vmatprep.mubr.f32.mxu0 0.0
      %651 = vmatmul.mubr.f32.gmra.mrb[0].mxu0 %v500
      %v652 = vpop.f32.mrb[0].mxu0
      %v653 = vadd.f32 %v441, %v652
      %v654 = vpop.f32.mrb[0].mxu0
      %655 = vmatprep.mubr.f32.mxu0 0.0
      %656 = vmatmul.mubr.f32.gmra.mrb[0].mxu0 %v503
      %v657 = vpop.f32.mrb[0].mxu0
      %v658 = vadd.f32 %v446, %v657
      %v659 = vpop.f32.mrb[0].mxu0
      %660 = vmatprep.mubr.f32.mxu0 0.0
      %661 = vmatmul.mubr.f32.gmra.mrb[0].mxu0 %v506
      %v662 = vpop.f32.mrb[0].mxu0
      %v663 = vadd.f32 %v451, %v662
      %v664 = vpop.f32.mrb[0].mxu0
      %665 = vdwg.mxu0
      %v666 = vld [vmem:[%s191 + $0x2] sm:$0xff]
      %v667 = vld [vmem:[%s191 + $0xa] sm:$0xff]
      %v668 = vld [vmem:[%s191 + $0x12] sm:$0xff]
      %v669 = vld [vmem:[%s191 + $0x1a] sm:$0xff]
      %v670 = vld [vmem:[%s191 + $0x22] sm:$0xff]
      %v671 = vld [vmem:[%s191 + $0x2a] sm:$0xff]
      %v672 = vld [vmem:[%s191 + $0x32] sm:$0xff]
      %v673 = vld [vmem:[%s191 + $0x3a] sm:$0xff]
      %v674 = vld [vmem:[%s191 + $0x42] sm:$0xff]
      %v675 = vld [vmem:[%s191 + $0x4a] sm:$0xff]
      %v676 = vld [vmem:[%s191 + $0x52] sm:$0xff]
      %v677 = vld [vmem:[%s191 + $0x5a] sm:$0xff]
      %v678 = vld [vmem:[%s191 + $0x62] sm:$0xff]
      %v679 = vld [vmem:[%s191 + $0x6a] sm:$0xff]
      %v680 = vld [vmem:[%s191 + $0x72] sm:$0xff]
      %v681 = vld [vmem:[%s191 + $0x7a] sm:$0xff]
      %v682 = vld [vmem:[%s191 + $0x82] sm:$0xff]
      %v683 = vld [vmem:[%s191 + $0x8a] sm:$0x3f]
      %s684 = scalar_lea.vmem %s1, 32
      %v685 = vld [vmem:[%s684] sm:$0xff]
      %v686 = vld [vmem:[%s684 + $0x8] sm:$0xf]
      %v688 = vsel %vm240, %v666, 0
      %v691 = vsel %vm240, %v667, 0
      %v694 = vsel %vm240, %v668, 0
      %v697 = vsel %vm240, %v669, 0
      %v700 = vsel %vm240, %v670, 0
      %v703 = vsel %vm240, %v671, 0
      %v706 = vsel %vm240, %v672, 0
      %v709 = vsel %vm240, %v673, 0
      %v712 = vsel %vm240, %v674, 0
      %v715 = vsel %vm240, %v675, 0
      %v718 = vsel %vm240, %v676, 0
      %v721 = vsel %vm240, %v677, 0
      %v724 = vsel %vm240, %v678, 0
      %v727 = vsel %vm240, %v679, 0
      %v730 = vsel %vm240, %v680, 0
      %v733 = vsel %vm240, %v681, 0
      %v736 = vsel %vm240, %v682, 0
      %v739 = vsel %vm240, %v683, 0
      %v742 = vsel %vm295, %v686, 0
      %744 = vmatprep.subr.mxu0 0.0
      %745 = vmatpush1.msra.mxu0 %v685
      %746 = vmatprep.subr.mxu0 0.0
      %747 = vmatpush1.msra.mxu0 %v742
      %748 = vmatprep.subr.mxu0 0.0
      %749 = vmatpush1.msra.mxu0 0.0
      %750 = vmatprep.subr.mxu0 0.0
      %751 = vmatpush1.msra.mxu0 0.0
      %752 = vmatprep.subr.mxu0 0.0
      %753 = vmatpush1.msra.mxu0 0.0
      %754 = vmatprep.subr.mxu0 0.0
      %755 = vmatpush1.msra.mxu0 0.0
      %756 = vmatprep.subr.mxu0 0.0
      %757 = vmatpush1.msra.mxu0 0.0
      %758 = vmatprep.subr.mxu0 0.0
      %759 = vmatpush1.msra.mxu0 0.0
      %760 = vmatprep.subr.mxu0 0.0
      %761 = vmatpush1.msra.mxu0 0.0
      %762 = vmatprep.subr.mxu0 0.0
      %763 = vmatpush1.msra.mxu0 0.0
      %764 = vmatprep.subr.mxu0 0.0
      %765 = vmatpush1.msra.mxu0 0.0
      %766 = vmatprep.subr.mxu0 0.0
      %767 = vmatpush1.msra.mxu0 0.0
      %768 = vmatprep.subr.mxu0 0.0
      %769 = vmatpush1.msra.mxu0 0.0
      %770 = vmatprep.subr.mxu0 0.0
      %771 = vmatpush1.msra.mxu0 0.0
      %772 = vmatprep.subr.mxu0 0.0
      %773 = vmatpush1.msra.mxu0 0.0
      %774 = vmatprep.subr.mxu0 0.0
      %775 = vmatpush1.msra.mxu0 0.0
      %776 = vmatprep.subr.mxu0 0.0
      %777 = vmatpush1.msra.mxu0 0.0
      %778 = vmatprep.subr.mxu0 0.0
      %779 = vmatpush1.msra.mxu0 0.0
      %780 = vmatprep.subr.mxu0 0.0
      %781 = vmatpush1.msra.mxu0 0.0
      %782 = vmatprep.subr.mxu0 0.0
      %783 = vmatpush1.msra.mxu0 0.0
      %784 = vmatprep.subr.mxu0 0.0
      %785 = vmatpush1.msra.mxu0 0.0
      %786 = vmatprep.subr.mxu0 0.0
      %787 = vmatpush1.msra.mxu0 0.0
      %788 = vmatprep.subr.mxu0 0.0
      %789 = vmatpush1.msra.mxu0 0.0
      %790 = vmatprep.subr.mxu0 0.0
      %791 = vmatpush1.msra.mxu0 0.0
      %792 = vmatprep.subr.mxu0 0.0
      %793 = vmatpush1.msra.mxu0 0.0
      %794 = vmatprep.subr.mxu0 0.0
      %795 = vmatpush1.msra.mxu0 0.0
      %796 = vmatprep.subr.mxu0 0.0
      %797 = vmatpush1.msra.mxu0 0.0
      %798 = vmatprep.subr.mxu0 0.0
      %799 = vmatpush1.msra.mxu0 0.0
      %800 = vmatprep.subr.mxu0 0.0
      %801 = vmatpush1.msra.mxu0 0.0
      %802 = vmatprep.subr.mxu0 0.0
      %803 = vmatpush1.msra.mxu0 0.0
      %804 = vmatprep.subr.mxu0 0.0
      %805 = vmatpush1.msra.mxu0 0.0
      %806 = vmatprep.subr.mxu0 0.0
      %807 = vmatpush1.msra.mxu0 0.0
      %808 = vmatprep.mubr.f32.mxu0 0.0
      %809 = vmatmul.mubr.f32.gmra.mrb[0].mxu0 %v688
      %v810 = vpop.f32.mrb[0].mxu0
      %v811 = vadd.f32 0.0, %v810
      %v812 = vpop.f32.mrb[0].mxu0
      %813 = vmatprep.mubr.f32.mxu0 0.0
      %814 = vmatmul.mubr.f32.gmra.mrb[0].mxu0 %v691
      %v815 = vpop.f32.mrb[0].mxu0
      %v816 = vadd.f32 0.0, %v815
      %v817 = vpop.f32.mrb[0].mxu0
      %818 = vmatprep.mubr.f32.mxu0 0.0
      %819 = vmatmul.mubr.f32.gmra.mrb[0].mxu0 %v694
      %v820 = vpop.f32.mrb[0].mxu0
      %v821 = vadd.f32 0.0, %v820
      %v822 = vpop.f32.mrb[0].mxu0
      %823 = vmatprep.mubr.f32.mxu0 0.0
      %824 = vmatmul.mubr.f32.gmra.mrb[0].mxu0 %v697
      %v825 = vpop.f32.mrb[0].mxu0
      %v826 = vadd.f32 0.0, %v825
      %v827 = vpop.f32.mrb[0].mxu0
      %828 = vmatprep.mubr.f32.mxu0 0.0
      %829 = vmatmul.mubr.f32.gmra.mrb[0].mxu0 %v700
      %v830 = vpop.f32.mrb[0].mxu0
      %v831 = vadd.f32 0.0, %v830
      %v832 = vpop.f32.mrb[0].mxu0
      %833 = vmatprep.mubr.f32.mxu0 0.0
      %834 = vmatmul.mubr.f32.gmra.mrb[0].mxu0 %v703
      %v835 = vpop.f32.mrb[0].mxu0
      %v836 = vadd.f32 0.0, %v835
      %v837 = vpop.f32.mrb[0].mxu0
      %838 = vmatprep.mubr.f32.mxu0 0.0
      %839 = vmatmul.mubr.f32.gmra.mrb[0].mxu0 %v706
      %v840 = vpop.f32.mrb[0].mxu0
      %v841 = vadd.f32 0.0, %v840
      %v842 = vpop.f32.mrb[0].mxu0
      %843 = vmatprep.mubr.f32.mxu0 0.0
      %844 = vmatmul.mubr.f32.gmra.mrb[0].mxu0 %v709
      %v845 = vpop.f32.mrb[0].mxu0
      %v846 = vadd.f32 0.0, %v845
      %v847 = vpop.f32.mrb[0].mxu0
      %848 = vmatprep.mubr.f32.mxu0 0.0
      %849 = vmatmul.mubr.f32.gmra.mrb[0].mxu0 %v712
      %v850 = vpop.f32.mrb[0].mxu0
      %v851 = vadd.f32 0.0, %v850
      %v852 = vpop.f32.mrb[0].mxu0
      %853 = vmatprep.mubr.f32.mxu0 0.0
      %854 = vmatmul.mubr.f32.gmra.mrb[0].mxu0 %v715
      %v855 = vpop.f32.mrb[0].mxu0
      %v856 = vadd.f32 0.0, %v855
      %v857 = vpop.f32.mrb[0].mxu0
      %858 = vmatprep.mubr.f32.mxu0 0.0
      %859 = vmatmul.mubr.f32.gmra.mrb[0].mxu0 %v718
      %v860 = vpop.f32.mrb[0].mxu0
      %v861 = vadd.f32 0.0, %v860
      %v862 = vpop.f32.mrb[0].mxu0
      %863 = vmatprep.mubr.f32.mxu0 0.0
      %864 = vmatmul.mubr.f32.gmra.mrb[0].mxu0 %v721
      %v865 = vpop.f32.mrb[0].mxu0
      %v866 = vadd.f32 0.0, %v865
      %v867 = vpop.f32.mrb[0].mxu0
      %868 = vmatprep.mubr.f32.mxu0 0.0
      %869 = vmatmul.mubr.f32.gmra.mrb[0].mxu0 %v724
      %v870 = vpop.f32.mrb[0].mxu0
      %v871 = vadd.f32 0.0, %v870
      %v872 = vpop.f32.mrb[0].mxu0
      %873 = vmatprep.mubr.f32.mxu0 0.0
      %874 = vmatmul.mubr.f32.gmra.mrb[0].mxu0 %v727
      %v875 = vpop.f32.mrb[0].mxu0
      %v876 = vadd.f32 0.0, %v875
      %v877 = vpop.f32.mrb[0].mxu0
      %878 = vmatprep.mubr.f32.mxu0 0.0
      %879 = vmatmul.mubr.f32.gmra.mrb[0].mxu0 %v730
      %v880 = vpop.f32.mrb[0].mxu0
      %v881 = vadd.f32 0.0, %v880
      %v882 = vpop.f32.mrb[0].mxu0
      %883 = vmatprep.mubr.f32.mxu0 0.0
      %884 = vmatmul.mubr.f32.gmra.mrb[0].mxu0 %v733
      %v885 = vpop.f32.mrb[0].mxu0
      %v886 = vadd.f32 0.0, %v885
      %v887 = vpop.f32.mrb[0].mxu0
      %888 = vmatprep.mubr.f32.mxu0 0.0
      %889 = vmatmul.mubr.f32.gmra.mrb[0].mxu0 %v736
      %v890 = vpop.f32.mrb[0].mxu0
      %v891 = vadd.f32 0.0, %v890
      %v892 = vpop.f32.mrb[0].mxu0
      %893 = vmatprep.mubr.f32.mxu0 0.0
      %894 = vmatmul.mubr.f32.gmra.mrb[0].mxu0 %v739
      %v895 = vpop.f32.mrb[0].mxu0
      %v896 = vadd.f32 0.0, %v895
      %v897 = vpop.f32.mrb[0].mxu0
      %898 = vdwg.mxu0
      %v899 = vadd.f32 %v578, %v811
      %v900 = vadd.f32 %v583, %v816
      %v901 = vadd.f32 %v588, %v821
      %v902 = vadd.f32 %v593, %v826
      %v903 = vadd.f32 %v598, %v831
      %v904 = vadd.f32 %v603, %v836
      %v905 = vadd.f32 %v608, %v841
      %v906 = vadd.f32 %v613, %v846
      %v907 = vadd.f32 %v618, %v851
      %v908 = vadd.f32 %v623, %v856
      %v909 = vadd.f32 %v628, %v861
      %v910 = vadd.f32 %v633, %v866
      %v911 = vadd.f32 %v638, %v871
      %v912 = vadd.f32 %v643, %v876
      %v913 = vadd.f32 %v648, %v881
      %v914 = vadd.f32 %v653, %v886
      %v915 = vadd.f32 %v658, %v891
      %v916 = vadd.f32 %v663, %v896
      %917 = vst [vmem:[%s197] sm:$0xff] %v899
      %918 = vst [vmem:[%s197 + $0x8] sm:$0xff] %v900
      %919 = vst [vmem:[%s197 + $0x10] sm:$0xff] %v901
      %920 = vst [vmem:[%s197 + $0x18] sm:$0xff] %v902
      %921 = vst [vmem:[%s197 + $0x20] sm:$0xff] %v903
      %922 = vst [vmem:[%s197 + $0x28] sm:$0xff] %v904
      %923 = vst [vmem:[%s197 + $0x30] sm:$0xff] %v905
      %924 = vst [vmem:[%s197 + $0x38] sm:$0xff] %v906
      %925 = vst [vmem:[%s197 + $0x40] sm:$0xff] %v907
      %926 = vst [vmem:[%s197 + $0x48] sm:$0xff] %v908
      %927 = vst [vmem:[%s197 + $0x50] sm:$0xff] %v909
      %928 = vst [vmem:[%s197 + $0x58] sm:$0xff] %v910
      %929 = vst [vmem:[%s197 + $0x60] sm:$0xff] %v911
      %930 = vst [vmem:[%s197 + $0x68] sm:$0xff] %v912
      %931 = vst [vmem:[%s197 + $0x70] sm:$0xff] %v913
      %932 = vst [vmem:[%s197 + $0x78] sm:$0xff] %v914
      %933 = vst [vmem:[%s197 + $0x80] sm:$0xff] %v915
      %934 = vst [vmem:[%s197 + $0x88] sm:$0x3f] %v916
      %935 = vst [vmem:[%s197 + $0x8e] sm:$0x3] 0.0
      %p936 = scmp.eq.s32.totalorder %s16, 0
      // Predicated region
      $region33: #{_base_double_conv.4} parent=31 // pred_check
        %p937 = pneg %p936
      $region34: #{_base_double_conv.4} parent=31 // pred_check_branch
        %939 = sbr.rel (%p937) target = $region36
      $region35: #{_base_double_conv.4} parent=31 // pred_region
        %940 = vst [vmem:[%s4] sm:$0x3] 0.0
      $region36: #{_base_double_conv.4} parent=31 // pred_fallthru
        _
      %v941 = vld [vmem:[%s2] sm:$0xff]
      %v942 = vld [vmem:[%s2 + $0x8] sm:$0xff]
      %v943 = vld [vmem:[%s2 + $0x10] sm:$0xff]
      %v944 = vld [vmem:[%s2 + $0x18] sm:$0xff]
      %v945 = vld [vmem:[%s2 + $0x20] sm:$0xff]
      %v946 = vld [vmem:[%s2 + $0x28] sm:$0xff]
      %v947 = vld [vmem:[%s2 + $0x30] sm:$0xff]
      %v948 = vld [vmem:[%s2 + $0x38] sm:$0xff]
      %v949 = vld [vmem:[%s2 + $0x40] sm:$0xff]
      %v950 = vld [vmem:[%s2 + $0x48] sm:$0xff]
      %v951 = vld [vmem:[%s2 + $0x50] sm:$0xff]
      %v952 = vld [vmem:[%s2 + $0x58] sm:$0xff]
      %v953 = vld [vmem:[%s2 + $0x60] sm:$0xff]
      %v954 = vld [vmem:[%s2 + $0x68] sm:$0xff]
      %v955 = vld [vmem:[%s2 + $0x70] sm:$0xff]
      %v956 = vld [vmem:[%s2 + $0x78] sm:$0xff]
      %v957 = vld [vmem:[%s2 + $0x80] sm:$0xff]
      %v958 = vld [vmem:[%s2 + $0x88] sm:$0x3f]
      %960 = vset.pattern.permute.xlu0 0
      %961 = vperm.xlu0 %960, %v941
      %v962 = vpop.permute.xlu0 %961
      %965 = vset.pattern.permute.xlu0 0
      %966 = vperm.xlu0 %965, %v942
      %v967 = vpop.permute.xlu0 %966
      %970 = vset.pattern.permute.xlu0 0
      %971 = vperm.xlu0 %970, %v943
      %v972 = vpop.permute.xlu0 %971
      %975 = vset.pattern.permute.xlu0 0
      %976 = vperm.xlu0 %975, %v944
      %v977 = vpop.permute.xlu0 %976
      %980 = vset.pattern.permute.xlu0 0
      %981 = vperm.xlu0 %980, %v945
      %v982 = vpop.permute.xlu0 %981
      %985 = vset.pattern.permute.xlu0 0
      %986 = vperm.xlu0 %985, %v946
      %v987 = vpop.permute.xlu0 %986
      %990 = vset.pattern.permute.xlu0 0
      %991 = vperm.xlu0 %990, %v947
      %v992 = vpop.permute.xlu0 %991
      %995 = vset.pattern.permute.xlu0 0
      %996 = vperm.xlu0 %995, %v948
      %v997 = vpop.permute.xlu0 %996
      %1000 = vset.pattern.permute.xlu0 0
      %1001 = vperm.xlu0 %1000, %v949
      %v1002 = vpop.permute.xlu0 %1001
      %1005 = vset.pattern.permute.xlu0 0
      %1006 = vperm.xlu0 %1005, %v950
      %v1007 = vpop.permute.xlu0 %1006
      %1010 = vset.pattern.permute.xlu0 0
      %1011 = vperm.xlu0 %1010, %v951
      %v1012 = vpop.permute.xlu0 %1011
      %1015 = vset.pattern.permute.xlu0 0
      %1016 = vperm.xlu0 %1015, %v952
      %v1017 = vpop.permute.xlu0 %1016
      %1020 = vset.pattern.permute.xlu0 0
      %1021 = vperm.xlu0 %1020, %v953
      %v1022 = vpop.permute.xlu0 %1021
      %1025 = vset.pattern.permute.xlu0 0
      %1026 = vperm.xlu0 %1025, %v954
      %v1027 = vpop.permute.xlu0 %1026
      %1030 = vset.pattern.permute.xlu0 0
      %1031 = vperm.xlu0 %1030, %v955
      %v1032 = vpop.permute.xlu0 %1031
      %1035 = vset.pattern.permute.xlu0 0
      %1036 = vperm.xlu0 %1035, %v956
      %v1037 = vpop.permute.xlu0 %1036
      %1040 = vset.pattern.permute.xlu0 0
      %1041 = vperm.xlu0 %1040, %v957
      %v1042 = vpop.permute.xlu0 %1041
      %1045 = vset.pattern.permute.xlu0 0
      %1046 = vperm.xlu0 %1045, %v958
      %v1047 = vpop.permute.xlu0 %1046
      %v1049 = vmul.f32 %v899, %v962
      %v1050 = vmul.f32 %v900, %v967
      %v1051 = vmul.f32 %v901, %v972
      %v1052 = vmul.f32 %v902, %v977
      %v1053 = vmul.f32 %v903, %v982
      %v1054 = vmul.f32 %v904, %v987
      %v1055 = vmul.f32 %v905, %v992
      %v1056 = vmul.f32 %v906, %v997
      %v1057 = vmul.f32 %v907, %v1002
      %v1058 = vmul.f32 %v908, %v1007
      %v1059 = vmul.f32 %v909, %v1012
      %v1060 = vmul.f32 %v910, %v1017
      %v1061 = vmul.f32 %v911, %v1022
      %v1062 = vmul.f32 %v912, %v1027
      %v1063 = vmul.f32 %v913, %v1032
      %v1064 = vmul.f32 %v914, %v1037
      %v1065 = vmul.f32 %v915, %v1042
      %v1066 = vmul.f32 %v916, %v1047
      %v1067 = vld [vmem:[%s4] sm:$0x1]
      %v1068 = vadd.f32 %v1049, %v1050
      %v1069 = vadd.f32 %v1068, %v1051
      %v1070 = vadd.f32 %v1069, %v1052
      %v1071 = vadd.f32 %v1070, %v1053
      %v1072 = vadd.f32 %v1071, %v1054
      %v1073 = vadd.f32 %v1072, %v1055
      %v1074 = vadd.f32 %v1073, %v1056
      %v1075 = vadd.f32 %v1074, %v1057
      %v1076 = vadd.f32 %v1075, %v1058
      %v1077 = vadd.f32 %v1076, %v1059
      %v1078 = vadd.f32 %v1077, %v1060
      %v1079 = vadd.f32 %v1078, %v1061
      %v1080 = vadd.f32 %v1079, %v1062
      %v1081 = vadd.f32 %v1080, %v1063
      %v1082 = vadd.f32 %v1081, %v1064
      %v1083 = vadd.f32 %v1082, %v1065
      %vm1084 = vcmask 1045504
      %v1085 = vsel %vm1084, %v1066, 0.0
      %v1086 = vadd.f32 %v1083, %v1085
      %v1087 = vrot.slane %v1086, 4
      %v1088 = vadd.f32 %v1086, %v1087
      %v1089 = vrot.slane %v1088, 2
      %v1090 = vadd.f32 %v1088, %v1089
      %v1091 = vrot.slane %v1090, 1
      %v1092 = vadd.f32 %v1090, %v1091
      %v1093 = vadd.f32 %v1067, %v1092
      %1094 = vst [vmem:[%s4] sm:$0x1] %v1093
      %v1095 = vld [vmem:[%s4 + $0x1] sm:$0x1]
      %v1096 = vmul.f32 %v1049, %v899
      %v1097 = vmul.f32 %v1050, %v900
      %v1098 = vmul.f32 %v1051, %v901
      %v1099 = vmul.f32 %v1052, %v902
      %v1100 = vmul.f32 %v1053, %v903
      %v1101 = vmul.f32 %v1054, %v904
      %v1102 = vmul.f32 %v1055, %v905
      %v1103 = vmul.f32 %v1056, %v906
      %v1104 = vmul.f32 %v1057, %v907
      %v1105 = vmul.f32 %v1058, %v908
      %v1106 = vmul.f32 %v1059, %v909
      %v1107 = vmul.f32 %v1060, %v910
      %v1108 = vmul.f32 %v1061, %v911
      %v1109 = vmul.f32 %v1062, %v912
      %v1110 = vmul.f32 %v1063, %v913
      %v1111 = vmul.f32 %v1064, %v914
      %v1112 = vmul.f32 %v1065, %v915
      %v1113 = vmul.f32 %v1066, %v916
      %v1114 = vadd.f32 %v1096, %v1097
      %v1115 = vadd.f32 %v1114, %v1098
      %v1116 = vadd.f32 %v1115, %v1099
      %v1117 = vadd.f32 %v1116, %v1100
      %v1118 = vadd.f32 %v1117, %v1101
      %v1119 = vadd.f32 %v1118, %v1102
      %v1120 = vadd.f32 %v1119, %v1103
      %v1121 = vadd.f32 %v1120, %v1104
      %v1122 = vadd.f32 %v1121, %v1105
      %v1123 = vadd.f32 %v1122, %v1106
      %v1124 = vadd.f32 %v1123, %v1107
      %v1125 = vadd.f32 %v1124, %v1108
      %v1126 = vadd.f32 %v1125, %v1109
      %v1127 = vadd.f32 %v1126, %v1110
      %v1128 = vadd.f32 %v1127, %v1111
      %v1129 = vadd.f32 %v1128, %v1112
      %v1130 = vsel %vm1084, %v1113, 0.0
      %v1131 = vadd.f32 %v1129, %v1130
      %v1132 = vrot.slane %v1131, 4
      %v1133 = vadd.f32 %v1131, %v1132
      %v1134 = vrot.slane %v1133, 2
      %v1135 = vadd.f32 %v1133, %v1134
      %v1136 = vrot.slane %v1135, 1
      %v1137 = vadd.f32 %v1135, %v1136
      %v1138 = vadd.f32 %v1095, %v1137
      %1139 = vst [vmem:[%s4 + $0x1] sm:$0x1] %v1138
      %s1140 = smul.u32 18, %s16
      %p1141 = scmp.lt.s32.totalorder %s1140, 71
      %s1142 = scalar_select %p1141, %s1140, 71
      %s1143 = smul.addr %s1142, 8
      %s1144 = scalar_lea.vmem %s3, %s1143
      // Predicated region
      $region37: #{_base_double_conv.4} parent=31 // pred_check
        %p1145 = pneg %p102
      $region38: #{_base_double_conv.4} parent=31 // pred_check_branch
        %1147 = sbr.rel (%p1145) target = $region40
      $region39: #{_base_double_conv.4} parent=31 // pred_region
        %s1148 = smul.u32 18, %s16
      $region40: #{_base_double_conv.4} parent=31 // pred_fallthru
        _
      // Predicated region
      $region41: #{_base_double_conv.4} parent=31 // pred_check
        %p1149 = pneg %p123
      $region42: #{_base_double_conv.4} parent=31 // pred_check_branch
        %1151 = sbr.rel (%p1149) target = $region44
      $region43: #{_base_double_conv.4} parent=31 // pred_region
        _
      $region44: #{_base_double_conv.4} parent=31 // pred_fallthru
        _
      // Predicated region
      $region45: #{_base_double_conv.4} parent=31 // pred_check
        %p1152 = pneg %p123
      $region46: #{_base_double_conv.4} parent=31 // pred_check_branch
        %1154 = sbr.rel (%p1152) target = $region48
      $region47: #{_base_double_conv.4} parent=31 // pred_region
        _
      $region48: #{_base_double_conv.4} parent=31 // pred_fallthru
        _
    $region32: #{_base_double_conv.4} parent=5 // pred_fallthru
      _
    %p1155 = scmp.le.s32.totalorder 2, %s11
    // Predicated region
    $region49: #{_base_double_conv.4} parent=5 // pred_check
      %p1156 = pneg %p1155
    $region50: #{_base_double_conv.4} parent=5 // pred_check_branch
      %1158 = sbr.rel (%p1156) target = $region52
    $region51: #{_base_double_conv.4} parent=5 // pred_region
      %s1159 = ssub.s32 %s11, 2
      // Predicated region
      $region53: #{_base_double_conv.4} parent=51 // pred_check
        %p1160 = pneg %p108
      $region54: #{_base_double_conv.4} parent=51 // pred_check_branch
        %1162 = sbr.rel (%p1160) target = $region56
      $region55: #{_base_double_conv.4} parent=51 // pred_region
        %s1163 = smul.u32 18, %s17
        %p1164 = scmp.lt.s32.totalorder %s1163, 71
        %s1165 = scalar_select %p1164, %s1163, 71
        %s1166 = smul.addr %s1165, 8
        %s1167 = scalar_lea.vmem %s3, %s1166
      $region56: #{_base_double_conv.4} parent=51 // pred_fallthru
        _
    $region52: #{_base_double_conv.4} parent=5 // pred_fallthru
      _
  $region6: #{_base_double_conv.4} parent=0 // loop_footer
    %s15 = sadd.s32 1, %s11
  $region7: #{_base_double_conv.4} parent=0 // loop_footer_branch
    %10 = sbr.rel target = $region3
  $region8: #{_base_double_conv.4} parent=0 // loop_exit
    _

// kernel: _base_double_conv.6
$region0: #{_base_double_conv.6}
  #allocation0 [shape = 'u32[]', space=smem, size = 0x4, offset = 0x4, fixed_abs, tag = 'smem constant byte address 0x4 - core index']
  #allocation1 [shape = 'u32[144,128]{1,0:T(1,128)}', space=vmem, size = 0x12000, scoped, tag = 'internal scratch']
  %s0 = inlined_call_operand.vmem [shape: f32[576,24], index: 0, kind: input, shape index: {}]
  %s1 = inlined_call_operand.vmem [shape: f32[3,24,128], index: 1, kind: input, shape index: {}]
  %s2 = inlined_call_operand.vmem [shape: f32[144,1], index: 2, kind: input, shape index: {}]
  %s3 = inlined_call_operand.vmem [shape: f32[576,128], index: 3, kind: output, shape index: {0}]
  %s4 = inlined_call_operand.vmem [shape: f32[2,128], index: 4, kind: output, shape index: {1}]
  %5 = xla_tuple %s3, %s4
  %s6 = sld [smem:[#allocation0]]
  $region57: #{_base_double_conv.6} parent=0
    _
  %s8 = ssub.s32 1, %s6
  %s9 = scalar_select 0, %s8, %s6
  loop: start=0, step=1, limit=6
  $region2: #{_base_double_conv.6} parent=0 // loop_pre_header
    _
  $region3: #{_base_double_conv.6} parent=0 // loop_header
    %s11 = sphi 0, %s15
    %p12 = scmp.ge.s32.totalorder %s11, 6
    %s21 = sphi 0, %s23
    %s24 = sphi 0, %s21
    %s25 = sphi 0, %s24
    %s41 = sphi 0, %s25
    %s45 = sphi 0, %s45
    %s47 = sphi 0, %s45
    %s48 = sphi 0, %s47
    %s62 = sphi 0, %s48
    %s66 = sphi 0, %s66
    %s68 = sphi 0, %s66
    %s69 = sphi 0, %s68
    %s83 = sphi 0, %s69
    %s89 = sphi 0, %s91
    %s92 = sphi 0, %s89
    %s93 = sphi 0, %s92
    %s109 = sphi 0, %s93
    %s113 = sphi 0, %s113
    %s115 = sphi 0, %s113
    %s116 = sphi 0, %s115
    %s130 = sphi 0, %s116
  $region4: #{_base_double_conv.6} parent=0 // loop_header_branch
    %14 = sbr.rel (%p12) target = $region8
  $region5: #{_base_double_conv.6} parent=0 // loop_body
    %s16 = ssub.s32 %s11, 1
    %s17 = ssub.s32 %s11, 2
    %s18 = sadd.s32 %s11, 1
    %s19 = ssub.s32 %s11, %s18
    %p20 = scmp.eq.s32.totalorder %s19, 0
    %s22 = sadd.s32 %s21, 1
    %s23 = scalar_select %p20, %s21, %s22
    %p26 = pneg %p20
    %p27 = scmp.eq.s32.totalorder %s11, 3
    %p28 = por %p26, %p27
    %p29 = scmp.ne.s32.totalorder %s21, %s24
    %p30 = scmp.eq.s32.totalorder %s11, 0
    %p31 = por %p29, %p30
    %p32 = scmp.ne.s32.totalorder %s21, %s24
    %p33 = scmp.eq.s32.totalorder %s16, 3
    %p34 = por %p32, %p33
    %p35 = scmp.ne.s32.totalorder %s24, %s25
    %p36 = scmp.eq.s32.totalorder %s16, 0
    %p37 = por %p35, %p36
    %p38 = scmp.ne.s32.totalorder %s24, %s25
    %p39 = scmp.eq.s32.totalorder %s17, 3
    %p40 = por %p38, %p39
    %p42 = scmp.ne.s32.totalorder %s25, %s41
    %p43 = scmp.eq.s32.totalorder %s17, 0
    %p44 = por %p42, %p43
    %s46 = sadd.s32 %s45, 1
    %p49 = scmp.eq.s32.totalorder %s11, 3
    %p50 = scmp.ne.s32.totalorder %s45, %s47
    %p51 = scmp.eq.s32.totalorder %s11, 0
    %p52 = por %p50, %p51
    %p53 = scmp.ne.s32.totalorder %s45, %s47
    %p54 = scmp.eq.s32.totalorder %s16, 3
    %p55 = por %p53, %p54
    %p56 = scmp.ne.s32.totalorder %s47, %s48
    %p57 = scmp.eq.s32.totalorder %s16, 0
    %p58 = por %p56, %p57
    %p59 = scmp.ne.s32.totalorder %s47, %s48
    %p60 = scmp.eq.s32.totalorder %s17, 3
    %p61 = por %p59, %p60
    %p63 = scmp.ne.s32.totalorder %s48, %s62
    %p64 = scmp.eq.s32.totalorder %s17, 0
    %p65 = por %p63, %p64
    %s67 = sadd.s32 %s66, 1
    %p70 = scmp.eq.s32.totalorder %s11, 3
    %p71 = scmp.ne.s32.totalorder %s66, %s68
    %p72 = scmp.eq.s32.totalorder %s11, 0
    %p73 = por %p71, %p72
    %p74 = scmp.ne.s32.totalorder %s66, %s68
    %p75 = scmp.eq.s32.totalorder %s16, 3
    %p76 = por %p74, %p75
    %p77 = scmp.ne.s32.totalorder %s68, %s69
    %p78 = scmp.eq.s32.totalorder %s16, 0
    %p79 = por %p77, %p78
    %p80 = scmp.ne.s32.totalorder %s68, %s69
    %p81 = scmp.eq.s32.totalorder %s17, 3
    %p82 = por %p80, %p81
    %p84 = scmp.ne.s32.totalorder %s69, %s83
    %p85 = scmp.eq.s32.totalorder %s17, 0
    %p86 = por %p84, %p85
    %s87 = ssub.s32 %s11, %s18
    %p88 = scmp.eq.s32.totalorder %s87, 0
    %s90 = sadd.s32 %s89, 1
    %s91 = scalar_select %p88, %s89, %s90
    %p94 = pneg %p88
    %p95 = scmp.eq.s32.totalorder %s11, 3
    %p96 = por %p94, %p95
    %p97 = scmp.ne.s32.totalorder %s89, %s92
    %p98 = scmp.eq.s32.totalorder %s11, 0
    %p99 = por %p97, %p98
    %p100 = scmp.ne.s32.totalorder %s89, %s92
    %p101 = scmp.eq.s32.totalorder %s16, 3
    %p102 = por %p100, %p101
    %p103 = scmp.ne.s32.totalorder %s92, %s93
    %p104 = scmp.eq.s32.totalorder %s16, 0
    %p105 = por %p103, %p104
    %p106 = scmp.ne.s32.totalorder %s92, %s93
    %p107 = scmp.eq.s32.totalorder %s17, 3
    %p108 = por %p106, %p107
    %p110 = scmp.ne.s32.totalorder %s93, %s109
    %p111 = scmp.eq.s32.totalorder %s17, 0
    %p112 = por %p110, %p111
    %s114 = sadd.s32 %s113, 1
    %p117 = scmp.eq.s32.totalorder %s11, 3
    %p118 = scmp.ne.s32.totalorder %s113, %s115
    %p119 = scmp.eq.s32.totalorder %s11, 0
    %p120 = por %p118, %p119
    %p121 = scmp.ne.s32.totalorder %s113, %s115
    %p122 = scmp.eq.s32.totalorder %s16, 3
    %p123 = por %p121, %p122
    %p124 = scmp.ne.s32.totalorder %s115, %s116
    %p125 = scmp.eq.s32.totalorder %s16, 0
    %p126 = por %p124, %p125
    %p127 = scmp.ne.s32.totalorder %s115, %s116
    %p128 = scmp.eq.s32.totalorder %s17, 3
    %p129 = por %p127, %p128
    %p131 = scmp.ne.s32.totalorder %s116, %s130
    %p132 = scmp.eq.s32.totalorder %s17, 0
    %p133 = por %p131, %p132
    %p134 = scmp.le.s32.totalorder 1, %s11
    %p135 = scmp.lt.s32.totalorder %s11, 5
    %p136 = pnand %p134, %p135
    %p137 = pneg %p136
    // Predicated region
    $region9: #{_base_double_conv.6} parent=5 // pred_check
      _
    $region10: #{_base_double_conv.6} parent=5 // pred_check_branch
      %139 = sbr.rel (%p136) target = $region12
    $region11: #{_base_double_conv.6} parent=5 // pred_region
      %s140 = ssub.s32 %s11, 1
      // Predicated region
      $region13: #{_base_double_conv.6} parent=11 // pred_check
        %p141 = pneg %p58
      $region14: #{_base_double_conv.6} parent=11 // pred_check_branch
        %143 = sbr.rel (%p141) target = $region16
      $region15: #{_base_double_conv.6} parent=11 // pred_region
        _
      $region16: #{_base_double_conv.6} parent=11 // pred_fallthru
        _
      // Predicated region
      $region17: #{_base_double_conv.6} parent=11 // pred_check
        %p144 = pneg %p79
      $region18: #{_base_double_conv.6} parent=11 // pred_check_branch
        %146 = sbr.rel (%p144) target = $region20
      $region19: #{_base_double_conv.6} parent=11 // pred_region
        _
      $region20: #{_base_double_conv.6} parent=11 // pred_fallthru
        _
    $region12: #{_base_double_conv.6} parent=5 // pred_fallthru
      _
    %p147 = scmp.lt.s32.totalorder %s11, 4
    // Predicated region
    $region21: #{_base_double_conv.6} parent=5 // pred_check
      %p148 = pneg %p147
    $region22: #{_base_double_conv.6} parent=5 // pred_check_branch
      %150 = sbr.rel (%p148) target = $region24
    $region23: #{_base_double_conv.6} parent=5 // pred_region
      // Predicated region
      $region25: #{_base_double_conv.6} parent=23 // pred_check
        %p151 = pneg %p31
      $region26: #{_base_double_conv.6} parent=23 // pred_check_branch
        %153 = sbr.rel (%p151) target = $region28
      $region27: #{_base_double_conv.6} parent=23 // pred_region
        %s154 = smul.u32 18, %s11
        %p155 = scmp.lt.s32.totalorder %s154, 71
        %s156 = scalar_select %p155, %s154, 71
        %s157 = smul.addr %s156, 8
        %s158 = scalar_lea.vmem %s0, %s157
        %s159 = smul.u32 18, %s11
      $region28: #{_base_double_conv.6} parent=23 // pred_fallthru
        _
    $region24: #{_base_double_conv.6} parent=5 // pred_fallthru
      _
    %p160 = scmp.le.s32.totalorder 1, %s11
    %p161 = scmp.lt.s32.totalorder %s11, 5
    %p162 = pnand %p160, %p161
    %p163 = pneg %p162
    // Predicated region
    $region29: #{_base_double_conv.6} parent=5 // pred_check
      _
    $region30: #{_base_double_conv.6} parent=5 // pred_check_branch
      %165 = sbr.rel (%p162) target = $region32
    $region31: #{_base_double_conv.6} parent=5 // pred_region
      %s166 = ssub.s32 %s11, 1
      %s167 = smul.u32 18, %s16
      %p168 = scmp.lt.s32.totalorder %s167, 71
      %s169 = scalar_select %p168, %s167, 71
      %s170 = smul.addr %s169, 8
      %s171 = scalar_lea.vmem %s0, %s170
      %p172 = pneg %p37
      %p173 = pneg %p34
      %p174 = pneg %p58
      %p175 = pneg %p55
      %p176 = pneg %p79
      %p177 = pneg %p76
      %p178 = pneg %p105
      %p179 = pneg %p102
      %s180 = smul.u32 18, %s16
      %p181 = scmp.lt.s32.totalorder %s180, 71
      %s182 = scalar_select %p181, %s180, 71
      %s183 = smul.addr %s182, 8
      %s184 = scalar_lea.vmem %s3, %s183
      %p185 = pneg %p126
      %p186 = pneg %p123
      %s187 = smul.u32 18, %s16
      %p188 = scmp.lt.s32.totalorder %s187, 71
      %s189 = scalar_select %p188, %s187, 71
      %s190 = smul.addr %s189, 8
      %s191 = scalar_lea.vmem %s0, %s190
      %s192 = smul.u32 18, %s16
      %s193 = smul.u32 18, %s16
      %p194 = scmp.lt.s32.totalorder %s193, 71
      %s195 = scalar_select %p194, %s193, 71
      %s196 = smul.addr %s195, 8
      %s197 = scalar_lea.vmem %s3, %s196
      %s198 = smul.u32 18, %s16
      %v199 = vld [vmem:[%s191] sm:$0xff]
      %v200 = vld [vmem:[%s191 + $0x8] sm:$0xff]
      %v201 = vld [vmem:[%s191 + $0x10] sm:$0xff]
      %v202 = vld [vmem:[%s191 + $0x18] sm:$0xff]
      %v203 = vld [vmem:[%s191 + $0x20] sm:$0xff]
      %v204 = vld [vmem:[%s191 + $0x28] sm:$0xff]
      %v205 = vld [vmem:[%s191 + $0x30] sm:$0xff]
      %v206 = vld [vmem:[%s191 + $0x38] sm:$0xff]
      %v207 = vld [vmem:[%s191 + $0x40] sm:$0xff]
      %v208 = vld [vmem:[%s191 + $0x48] sm:$0xff]
      %v209 = vld [vmem:[%s191 + $0x50] sm:$0xff]
      %v210 = vld [vmem:[%s191 + $0x58] sm:$0xff]
      %v211 = vld [vmem:[%s191 + $0x60] sm:$0xff]
      %v212 = vld [vmem:[%s191 + $0x68] sm:$0xff]
      %v213 = vld [vmem:[%s191 + $0x70] sm:$0xff]
      %v214 = vld [vmem:[%s191 + $0x78] sm:$0xff]
      %v215 = vld [vmem:[%s191 + $0x80] sm:$0xff]
      %v216 = vld [vmem:[%s191 + $0x88] sm:$0x3f]
      %v217 = vld [vmem:[%s1] sm:$0xff]
      %v218 = vld [vmem:[%s1 + $0x8] sm:$0xff]
      %v219 = vld [vmem:[%s1 + $0x10] sm:$0xff]
      %v220 = vld [vmem:[%s191 + $0x1] sm:$0xff]
      %v221 = vld [vmem:[%s191 + $0x9] sm:$0xff]
      %v222 = vld [vmem:[%s191 + $0x11] sm:$0xff]
      %v223 = vld [vmem:[%s191 + $0x19] sm:$0xff]
      %v224 = vld [vmem:[%s191 + $0x21] sm:$0xff]
      %v225 = vld [vmem:[%s191 + $0x29] sm:$0xff]
      %v226 = vld [vmem:[%s191 + $0x31] sm:$0xff]
      %v227 = vld [vmem:[%s191 + $0x39] sm:$0xff]
      %v228 = vld [vmem:[%s191 + $0x41] sm:$0xff]
      %v229 = vld [vmem:[%s191 + $0x49] sm:$0xff]
      %v230 = vld [vmem:[%s191 + $0x51] sm:$0xff]
      %v231 = vld [vmem:[%s191 + $0x59] sm:$0xff]
      %v232 = vld [vmem:[%s191 + $0x61] sm:$0xff]
      %v233 = vld [vmem:[%s191 + $0x69] sm:$0xff]
      %v234 = vld [vmem:[%s191 + $0x71] sm:$0xff]
      %v235 = vld [vmem:[%s191 + $0x79] sm:$0xff]
      %v236 = vld [vmem:[%s191 + $0x81] sm:$0xff]
      %v237 = vld [vmem:[%s191 + $0x89] sm:$0x3f]
      %s238 = scalar_lea.vmem %s1, 24
      %v239 = vld [vmem:[%s238] sm:$0xff]
      %v240 = vld [vmem:[%s238 + $0x8] sm:$0xff]
      %v241 = vld [vmem:[%s238 + $0x10] sm:$0xff]
      %vm242 = vcmask 195584
      %v244 = vsel %vm242, %v220, 0
      %v247 = vsel %vm242, %v221, 0
      %v250 = vsel %vm242, %v222, 0
      %v253 = vsel %vm242, %v223, 0
      %v256 = vsel %vm242, %v224, 0
      %v259 = vsel %vm242, %v225, 0
      %v262 = vsel %vm242, %v226, 0
      %v265 = vsel %vm242, %v227, 0
      %v268 = vsel %vm242, %v228, 0
      %v271 = vsel %vm242, %v229, 0
      %v274 = vsel %vm242, %v230, 0
      %v277 = vsel %vm242, %v231, 0
      %v280 = vsel %vm242, %v232, 0
      %v283 = vsel %vm242, %v233, 0
      %v286 = vsel %vm242, %v234, 0
      %v289 = vsel %vm242, %v235, 0
      %v292 = vsel %vm242, %v236, 0
      %v295 = vsel %vm242, %v237, 0
      %297 = vmatprep.subr.mxu0 0.0
      %298 = vmatpush1.msra.mxu0 %v239
      %299 = vmatprep.subr.mxu0 0.0
      %300 = vmatpush1.msra.mxu0 %v240
      %301 = vmatprep.subr.mxu0 0.0
      %302 = vmatpush1.msra.mxu0 %v241
      %303 = vmatprep.subr.mxu0 0.0
      %304 = vmatpush1.msra.mxu0 0.0
      %305 = vmatprep.subr.mxu0 0.0
      %306 = vmatpush1.msra.mxu0 0.0
      %307 = vmatprep.subr.mxu0 0.0
      %308 = vmatpush1.msra.mxu0 0.0
      %309 = vmatprep.subr.mxu0 0.0
      %310 = vmatpush1.msra.mxu0 0.0
      %311 = vmatprep.subr.mxu0 0.0
      %312 = vmatpush1.msra.mxu0 0.0
      %313 = vmatprep.subr.mxu0 0.0
      %314 = vmatpush1.msra.mxu0 0.0
      %315 = vmatprep.subr.mxu0 0.0
      %316 = vmatpush1.msra.mxu0 0.0
      %317 = vmatprep.subr.mxu0 0.0
      %318 = vmatpush1.msra.mxu0 0.0
      %319 = vmatprep.subr.mxu0 0.0
      %320 = vmatpush1.msra.mxu0 0.0
      %321 = vmatprep.subr.mxu0 0.0
      %322 = vmatpush1.msra.mxu0 0.0
      %323 = vmatprep.subr.mxu0 0.0
      %324 = vmatpush1.msra.mxu0 0.0
      %325 = vmatprep.subr.mxu0 0.0
      %326 = vmatpush1.msra.mxu0 0.0
      %327 = vmatprep.subr.mxu0 0.0
      %328 = vmatpush1.msra.mxu0 0.0
      %329 = vmatprep.subr.mxu0 0.0
      %330 = vmatpush1.msra.mxu0 0.0
      %331 = vmatprep.subr.mxu0 0.0
      %332 = vmatpush1.msra.mxu0 0.0
      %333 = vmatprep.subr.mxu0 0.0
      %334 = vmatpush1.msra.mxu0 0.0
      %335 = vmatprep.subr.mxu0 0.0
      %336 = vmatpush1.msra.mxu0 0.0
      %337 = vmatprep.subr.mxu0 0.0
      %338 = vmatpush1.msra.mxu0 0.0
      %339 = vmatprep.subr.mxu0 0.0
      %340 = vmatpush1.msra.mxu0 0.0
      %341 = vmatprep.subr.mxu0 0.0
      %342 = vmatpush1.msra.mxu0 0.0
      %343 = vmatprep.subr.mxu0 0.0
      %344 = vmatpush1.msra.mxu0 0.0
      %345 = vmatprep.subr.mxu0 0.0
      %346 = vmatpush1.msra.mxu0 0.0
      %347 = vmatprep.subr.mxu0 0.0
      %348 = vmatpush1.msra.mxu0 0.0
      %349 = vmatprep.subr.mxu0 0.0
      %350 = vmatpush1.msra.mxu0 0.0
      %351 = vmatprep.subr.mxu0 0.0
      %352 = vmatpush1.msra.mxu0 0.0
      %353 = vmatprep.subr.mxu0 0.0
      %354 = vmatpush1.msra.mxu0 0.0
      %355 = vmatprep.subr.mxu0 0.0
      %356 = vmatpush1.msra.mxu0 0.0
      %357 = vmatprep.subr.mxu0 0.0
      %358 = vmatpush1.msra.mxu0 0.0
      %359 = vmatprep.subr.mxu0 0.0
      %360 = vmatpush1.msra.mxu0 0.0
      %361 = vmatprep.mubr.f32.mxu0 0.0
      %362 = vmatmul.mubr.f32.gmra.mrb[0].mxu0 %v244
      %v363 = vpop.f32.mrb[0].mxu0
      %v364 = vadd.f32 0.0, %v363
      %v365 = vpop.f32.mrb[0].mxu0
      %366 = vmatprep.mubr.f32.mxu0 0.0
      %367 = vmatmul.mubr.f32.gmra.mrb[0].mxu0 %v247
      %v368 = vpop.f32.mrb[0].mxu0
      %v369 = vadd.f32 0.0, %v368
      %v370 = vpop.f32.mrb[0].mxu0
      %371 = vmatprep.mubr.f32.mxu0 0.0
      %372 = vmatmul.mubr.f32.gmra.mrb[0].mxu0 %v250
      %v373 = vpop.f32.mrb[0].mxu0
      %v374 = vadd.f32 0.0, %v373
      %v375 = vpop.f32.mrb[0].mxu0
      %376 = vmatprep.mubr.f32.mxu0 0.0
      %377 = vmatmul.mubr.f32.gmra.mrb[0].mxu0 %v253
      %v378 = vpop.f32.mrb[0].mxu0
      %v379 = vadd.f32 0.0, %v378
      %v380 = vpop.f32.mrb[0].mxu0
      %381 = vmatprep.mubr.f32.mxu0 0.0
      %382 = vmatmul.mubr.f32.gmra.mrb[0].mxu0 %v256
      %v383 = vpop.f32.mrb[0].mxu0
      %v384 = vadd.f32 0.0, %v383
      %v385 = vpop.f32.mrb[0].mxu0
      %386 = vmatprep.mubr.f32.mxu0 0.0
      %387 = vmatmul.mubr.f32.gmra.mrb[0].mxu0 %v259
      %v388 = vpop.f32.mrb[0].mxu0
      %v389 = vadd.f32 0.0, %v388
      %v390 = vpop.f32.mrb[0].mxu0
      %391 = vmatprep.mubr.f32.mxu0 0.0
      %392 = vmatmul.mubr.f32.gmra.mrb[0].mxu0 %v262
      %v393 = vpop.f32.mrb[0].mxu0
      %v394 = vadd.f32 0.0, %v393
      %v395 = vpop.f32.mrb[0].mxu0
      %396 = vmatprep.mubr.f32.mxu0 0.0
      %397 = vmatmul.mubr.f32.gmra.mrb[0].mxu0 %v265
      %v398 = vpop.f32.mrb[0].mxu0
      %v399 = vadd.f32 0.0, %v398
      %v400 = vpop.f32.mrb[0].mxu0
      %401 = vmatprep.mubr.f32.mxu0 0.0
      %402 = vmatmul.mubr.f32.gmra.mrb[0].mxu0 %v268
      %v403 = vpop.f32.mrb[0].mxu0
      %v404 = vadd.f32 0.0, %v403
      %v405 = vpop.f32.mrb[0].mxu0
      %406 = vmatprep.mubr.f32.mxu0 0.0
      %407 = vmatmul.mubr.f32.gmra.mrb[0].mxu0 %v271
      %v408 = vpop.f32.mrb[0].mxu0
      %v409 = vadd.f32 0.0, %v408
      %v410 = vpop.f32.mrb[0].mxu0
      %411 = vmatprep.mubr.f32.mxu0 0.0
      %412 = vmatmul.mubr.f32.gmra.mrb[0].mxu0 %v274
      %v413 = vpop.f32.mrb[0].mxu0
      %v414 = vadd.f32 0.0, %v413
      %v415 = vpop.f32.mrb[0].mxu0
      %416 = vmatprep.mubr.f32.mxu0 0.0
      %417 = vmatmul.mubr.f32.gmra.mrb[0].mxu0 %v277
      %v418 = vpop.f32.mrb[0].mxu0
      %v419 = vadd.f32 0.0, %v418
      %v420 = vpop.f32.mrb[0].mxu0
      %421 = vmatprep.mubr.f32.mxu0 0.0
      %422 = vmatmul.mubr.f32.gmra.mrb[0].mxu0 %v280
      %v423 = vpop.f32.mrb[0].mxu0
      %v424 = vadd.f32 0.0, %v423
      %v425 = vpop.f32.mrb[0].mxu0
      %426 = vmatprep.mubr.f32.mxu0 0.0
      %427 = vmatmul.mubr.f32.gmra.mrb[0].mxu0 %v283
      %v428 = vpop.f32.mrb[0].mxu0
      %v429 = vadd.f32 0.0, %v428
      %v430 = vpop.f32.mrb[0].mxu0
      %431 = vmatprep.mubr.f32.mxu0 0.0
      %432 = vmatmul.mubr.f32.gmra.mrb[0].mxu0 %v286
      %v433 = vpop.f32.mrb[0].mxu0
      %v434 = vadd.f32 0.0, %v433
      %v435 = vpop.f32.mrb[0].mxu0
      %436 = vmatprep.mubr.f32.mxu0 0.0
      %437 = vmatmul.mubr.f32.gmra.mrb[0].mxu0 %v289
      %v438 = vpop.f32.mrb[0].mxu0
      %v439 = vadd.f32 0.0, %v438
      %v440 = vpop.f32.mrb[0].mxu0
      %441 = vmatprep.mubr.f32.mxu0 0.0
      %442 = vmatmul.mubr.f32.gmra.mrb[0].mxu0 %v292
      %v443 = vpop.f32.mrb[0].mxu0
      %v444 = vadd.f32 0.0, %v443
      %v445 = vpop.f32.mrb[0].mxu0
      %446 = vmatprep.mubr.f32.mxu0 0.0
      %447 = vmatmul.mubr.f32.gmra.mrb[0].mxu0 %v295
      %v448 = vpop.f32.mrb[0].mxu0
      %v449 = vadd.f32 0.0, %v448
      %v450 = vpop.f32.mrb[0].mxu0
      %451 = vdwg.mxu0
      %v453 = vsel %vm242, %v199, 0
      %v456 = vsel %vm242, %v200, 0
      %v459 = vsel %vm242, %v201, 0
      %v462 = vsel %vm242, %v202, 0
      %v465 = vsel %vm242, %v203, 0
      %v468 = vsel %vm242, %v204, 0
      %v471 = vsel %vm242, %v205, 0
      %v474 = vsel %vm242, %v206, 0
      %v477 = vsel %vm242, %v207, 0
      %v480 = vsel %vm242, %v208, 0
      %v483 = vsel %vm242, %v209, 0
      %v486 = vsel %vm242, %v210, 0
      %v489 = vsel %vm242, %v211, 0
      %v492 = vsel %vm242, %v212, 0
      %v495 = vsel %vm242, %v213, 0
      %v498 = vsel %vm242, %v214, 0
      %v501 = vsel %vm242, %v215, 0
      %v504 = vsel %vm242, %v216, 0
      %506 = vmatprep.subr.mxu0 0.0
      %507 = vmatpush1.msra.mxu0 %v217
      %508 = vmatprep.subr.mxu0 0.0
      %509 = vmatpush1.msra.mxu0 %v218
      %510 = vmatprep.subr.mxu0 0.0
      %511 = vmatpush1.msra.mxu0 %v219
      %512 = vmatprep.subr.mxu0 0.0
      %513 = vmatpush1.msra.mxu0 0.0
      %514 = vmatprep.subr.mxu0 0.0
      %515 = vmatpush1.msra.mxu0 0.0
      %516 = vmatprep.subr.mxu0 0.0
      %517 = vmatpush1.msra.mxu0 0.0
      %518 = vmatprep.subr.mxu0 0.0
      %519 = vmatpush1.msra.mxu0 0.0
      %520 = vmatprep.subr.mxu0 0.0
      %521 = vmatpush1.msra.mxu0 0.0
      %522 = vmatprep.subr.mxu0 0.0
      %523 = vmatpush1.msra.mxu0 0.0
      %524 = vmatprep.subr.mxu0 0.0
      %525 = vmatpush1.msra.mxu0 0.0
      %526 = vmatprep.subr.mxu0 0.0
      %527 = vmatpush1.msra.mxu0 0.0
      %528 = vmatprep.subr.mxu0 0.0
      %529 = vmatpush1.msra.mxu0 0.0
      %530 = vmatprep.subr.mxu0 0.0
      %531 = vmatpush1.msra.mxu0 0.0
      %532 = vmatprep.subr.mxu0 0.0
      %533 = vmatpush1.msra.mxu0 0.0
      %534 = vmatprep.subr.mxu0 0.0
      %535 = vmatpush1.msra.mxu0 0.0
      %536 = vmatprep.subr.mxu0 0.0
      %537 = vmatpush1.msra.mxu0 0.0
      %538 = vmatprep.subr.mxu0 0.0
      %539 = vmatpush1.msra.mxu0 0.0
      %540 = vmatprep.subr.mxu0 0.0
      %541 = vmatpush1.msra.mxu0 0.0
      %542 = vmatprep.subr.mxu0 0.0
      %543 = vmatpush1.msra.mxu0 0.0
      %544 = vmatprep.subr.mxu0 0.0
      %545 = vmatpush1.msra.mxu0 0.0
      %546 = vmatprep.subr.mxu0 0.0
      %547 = vmatpush1.msra.mxu0 0.0
      %548 = vmatprep.subr.mxu0 0.0
      %549 = vmatpush1.msra.mxu0 0.0
      %550 = vmatprep.subr.mxu0 0.0
      %551 = vmatpush1.msra.mxu0 0.0
      %552 = vmatprep.subr.mxu0 0.0
      %553 = vmatpush1.msra.mxu0 0.0
      %554 = vmatprep.subr.mxu0 0.0
      %555 = vmatpush1.msra.mxu0 0.0
      %556 = vmatprep.subr.mxu0 0.0
      %557 = vmatpush1.msra.mxu0 0.0
      %558 = vmatprep.subr.mxu0 0.0
      %559 = vmatpush1.msra.mxu0 0.0
      %560 = vmatprep.subr.mxu0 0.0
      %561 = vmatpush1.msra.mxu0 0.0
      %562 = vmatprep.subr.mxu0 0.0
      %563 = vmatpush1.msra.mxu0 0.0
      %564 = vmatprep.subr.mxu0 0.0
      %565 = vmatpush1.msra.mxu0 0.0
      %566 = vmatprep.subr.mxu0 0.0
      %567 = vmatpush1.msra.mxu0 0.0
      %568 = vmatprep.subr.mxu0 0.0
      %569 = vmatpush1.msra.mxu0 0.0
      %570 = vmatprep.mubr.f32.mxu0 0.0
      %571 = vmatmul.mubr.f32.gmra.mrb[0].mxu0 %v453
      %v572 = vpop.f32.mrb[0].mxu0
      %v573 = vadd.f32 %v364, %v572
      %v574 = vpop.f32.mrb[0].mxu0
      %575 = vmatprep.mubr.f32.mxu0 0.0
      %576 = vmatmul.mubr.f32.gmra.mrb[0].mxu0 %v456
      %v577 = vpop.f32.mrb[0].mxu0
      %v578 = vadd.f32 %v369, %v577
      %v579 = vpop.f32.mrb[0].mxu0
      %580 = vmatprep.mubr.f32.mxu0 0.0
      %581 = vmatmul.mubr.f32.gmra.mrb[0].mxu0 %v459
      %v582 = vpop.f32.mrb[0].mxu0
      %v583 = vadd.f32 %v374, %v582
      %v584 = vpop.f32.mrb[0].mxu0
      %585 = vmatprep.mubr.f32.mxu0 0.0
      %586 = vmatmul.mubr.f32.gmra.mrb[0].mxu0 %v462
      %v587 = vpop.f32.mrb[0].mxu0
      %v588 = vadd.f32 %v379, %v587
      %v589 = vpop.f32.mrb[0].mxu0
      %590 = vmatprep.mubr.f32.mxu0 0.0
      %591 = vmatmul.mubr.f32.gmra.mrb[0].mxu0 %v465
      %v592 = vpop.f32.mrb[0].mxu0
      %v593 = vadd.f32 %v384, %v592
      %v594 = vpop.f32.mrb[0].mxu0
      %595 = vmatprep.mubr.f32.mxu0 0.0
      %596 = vmatmul.mubr.f32.gmra.mrb[0].mxu0 %v468
      %v597 = vpop.f32.mrb[0].mxu0
      %v598 = vadd.f32 %v389, %v597
      %v599 = vpop.f32.mrb[0].mxu0
      %600 = vmatprep.mubr.f32.mxu0 0.0
      %601 = vmatmul.mubr.f32.gmra.mrb[0].mxu0 %v471
      %v602 = vpop.f32.mrb[0].mxu0
      %v603 = vadd.f32 %v394, %v602
      %v604 = vpop.f32.mrb[0].mxu0
      %605 = vmatprep.mubr.f32.mxu0 0.0
      %606 = vmatmul.mubr.f32.gmra.mrb[0].mxu0 %v474
      %v607 = vpop.f32.mrb[0].mxu0
      %v608 = vadd.f32 %v399, %v607
      %v609 = vpop.f32.mrb[0].mxu0
      %610 = vmatprep.mubr.f32.mxu0 0.0
      %611 = vmatmul.mubr.f32.gmra.mrb[0].mxu0 %v477
      %v612 = vpop.f32.mrb[0].mxu0
      %v613 = vadd.f32 %v404, %v612
      %v614 = vpop.f32.mrb[0].mxu0
      %615 = vmatprep.mubr.f32.mxu0 0.0
      %616 = vmatmul.mubr.f32.gmra.mrb[0].mxu0 %v480
      %v617 = vpop.f32.mrb[0].mxu0
      %v618 = vadd.f32 %v409, %v617
      %v619 = vpop.f32.mrb[0].mxu0
      %620 = vmatprep.mubr.f32.mxu0 0.0
      %621 = vmatmul.mubr.f32.gmra.mrb[0].mxu0 %v483
      %v622 = vpop.f32.mrb[0].mxu0
      %v623 = vadd.f32 %v414, %v622
      %v624 = vpop.f32.mrb[0].mxu0
      %625 = vmatprep.mubr.f32.mxu0 0.0
      %626 = vmatmul.mubr.f32.gmra.mrb[0].mxu0 %v486
      %v627 = vpop.f32.mrb[0].mxu0
      %v628 = vadd.f32 %v419, %v627
      %v629 = vpop.f32.mrb[0].mxu0
      %630 = vmatprep.mubr.f32.mxu0 0.0
      %631 = vmatmul.mubr.f32.gmra.mrb[0].mxu0 %v489
      %v632 = vpop.f32.mrb[0].mxu0
      %v633 = vadd.f32 %v424, %v632
      %v634 = vpop.f32.mrb[0].mxu0
      %635 = vmatprep.mubr.f32.mxu0 0.0
      %636 = vmatmul.mubr.f32.gmra.mrb[0].mxu0 %v492
      %v637 = vpop.f32.mrb[0].mxu0
      %v638 = vadd.f32 %v429, %v637
      %v639 = vpop.f32.mrb[0].mxu0
      %640 = vmatprep.mubr.f32.mxu0 0.0
      %641 = vmatmul.mubr.f32.gmra.mrb[0].mxu0 %v495
      %v642 = vpop.f32.mrb[0].mxu0
      %v643 = vadd.f32 %v434, %v642
      %v644 = vpop.f32.mrb[0].mxu0
      %645 = vmatprep.mubr.f32.mxu0 0.0
      %646 = vmatmul.mubr.f32.gmra.mrb[0].mxu0 %v498
      %v647 = vpop.f32.mrb[0].mxu0
      %v648 = vadd.f32 %v439, %v647
      %v649 = vpop.f32.mrb[0].mxu0
      %650 = vmatprep.mubr.f32.mxu0 0.0
      %651 = vmatmul.mubr.f32.gmra.mrb[0].mxu0 %v501
      %v652 = vpop.f32.mrb[0].mxu0
      %v653 = vadd.f32 %v444, %v652
      %v654 = vpop.f32.mrb[0].mxu0
      %655 = vmatprep.mubr.f32.mxu0 0.0
      %656 = vmatmul.mubr.f32.gmra.mrb[0].mxu0 %v504
      %v657 = vpop.f32.mrb[0].mxu0
      %v658 = vadd.f32 %v449, %v657
      %v659 = vpop.f32.mrb[0].mxu0
      %660 = vdwg.mxu0
      %v661 = vld [vmem:[%s191 + $0x2] sm:$0xff]
      %v662 = vld [vmem:[%s191 + $0xa] sm:$0xff]
      %v663 = vld [vmem:[%s191 + $0x12] sm:$0xff]
      %v664 = vld [vmem:[%s191 + $0x1a] sm:$0xff]
      %v665 = vld [vmem:[%s191 + $0x22] sm:$0xff]
      %v666 = vld [vmem:[%s191 + $0x2a] sm:$0xff]
      %v667 = vld [vmem:[%s191 + $0x32] sm:$0xff]
      %v668 = vld [vmem:[%s191 + $0x3a] sm:$0xff]
      %v669 = vld [vmem:[%s191 + $0x42] sm:$0xff]
      %v670 = vld [vmem:[%s191 + $0x4a] sm:$0xff]
      %v671 = vld [vmem:[%s191 + $0x52] sm:$0xff]
      %v672 = vld [vmem:[%s191 + $0x5a] sm:$0xff]
      %v673 = vld [vmem:[%s191 + $0x62] sm:$0xff]
      %v674 = vld [vmem:[%s191 + $0x6a] sm:$0xff]
      %v675 = vld [vmem:[%s191 + $0x72] sm:$0xff]
      %v676 = vld [vmem:[%s191 + $0x7a] sm:$0xff]
      %v677 = vld [vmem:[%s191 + $0x82] sm:$0xff]
      %v678 = vld [vmem:[%s191 + $0x8a] sm:$0x3f]
      %s679 = scalar_lea.vmem %s1, 48
      %v680 = vld [vmem:[%s679] sm:$0xff]
      %v681 = vld [vmem:[%s679 + $0x8] sm:$0xff]
      %v682 = vld [vmem:[%s679 + $0x10] sm:$0xff]
      %v684 = vsel %vm242, %v661, 0
      %v687 = vsel %vm242, %v662, 0
      %v690 = vsel %vm242, %v663, 0
      %v693 = vsel %vm242, %v664, 0
      %v696 = vsel %vm242, %v665, 0
      %v699 = vsel %vm242, %v666, 0
      %v702 = vsel %vm242, %v667, 0
      %v705 = vsel %vm242, %v668, 0
      %v708 = vsel %vm242, %v669, 0
      %v711 = vsel %vm242, %v670, 0
      %v714 = vsel %vm242, %v671, 0
      %v717 = vsel %vm242, %v672, 0
      %v720 = vsel %vm242, %v673, 0
      %v723 = vsel %vm242, %v674, 0
      %v726 = vsel %vm242, %v675, 0
      %v729 = vsel %vm242, %v676, 0
      %v732 = vsel %vm242, %v677, 0
      %v735 = vsel %vm242, %v678, 0
      %737 = vmatprep.subr.mxu0 0.0
      %738 = vmatpush1.msra.mxu0 %v680
      %739 = vmatprep.subr.mxu0 0.0
      %740 = vmatpush1.msra.mxu0 %v681
      %741 = vmatprep.subr.mxu0 0.0
      %742 = vmatpush1.msra.mxu0 %v682
      %743 = vmatprep.subr.mxu0 0.0
      %744 = vmatpush1.msra.mxu0 0.0
      %745 = vmatprep.subr.mxu0 0.0
      %746 = vmatpush1.msra.mxu0 0.0
      %747 = vmatprep.subr.mxu0 0.0
      %748 = vmatpush1.msra.mxu0 0.0
      %749 = vmatprep.subr.mxu0 0.0
      %750 = vmatpush1.msra.mxu0 0.0
      %751 = vmatprep.subr.mxu0 0.0
      %752 = vmatpush1.msra.mxu0 0.0
      %753 = vmatprep.subr.mxu0 0.0
      %754 = vmatpush1.msra.mxu0 0.0
      %755 = vmatprep.subr.mxu0 0.0
      %756 = vmatpush1.msra.mxu0 0.0
      %757 = vmatprep.subr.mxu0 0.0
      %758 = vmatpush1.msra.mxu0 0.0
      %759 = vmatprep.subr.mxu0 0.0
      %760 = vmatpush1.msra.mxu0 0.0
      %761 = vmatprep.subr.mxu0 0.0
      %762 = vmatpush1.msra.mxu0 0.0
      %763 = vmatprep.subr.mxu0 0.0
      %764 = vmatpush1.msra.mxu0 0.0
      %765 = vmatprep.subr.mxu0 0.0
      %766 = vmatpush1.msra.mxu0 0.0
      %767 = vmatprep.subr.mxu0 0.0
      %768 = vmatpush1.msra.mxu0 0.0
      %769 = vmatprep.subr.mxu0 0.0
      %770 = vmatpush1.msra.mxu0 0.0
      %771 = vmatprep.subr.mxu0 0.0
      %772 = vmatpush1.msra.mxu0 0.0
      %773 = vmatprep.subr.mxu0 0.0
      %774 = vmatpush1.msra.mxu0 0.0
      %775 = vmatprep.subr.mxu0 0.0
      %776 = vmatpush1.msra.mxu0 0.0
      %777 = vmatprep.subr.mxu0 0.0
      %778 = vmatpush1.msra.mxu0 0.0
      %779 = vmatprep.subr.mxu0 0.0
      %780 = vmatpush1.msra.mxu0 0.0
      %781 = vmatprep.subr.mxu0 0.0
      %782 = vmatpush1.msra.mxu0 0.0
      %783 = vmatprep.subr.mxu0 0.0
      %784 = vmatpush1.msra.mxu0 0.0
      %785 = vmatprep.subr.mxu0 0.0
      %786 = vmatpush1.msra.mxu0 0.0
      %787 = vmatprep.subr.mxu0 0.0
      %788 = vmatpush1.msra.mxu0 0.0
      %789 = vmatprep.subr.mxu0 0.0
      %790 = vmatpush1.msra.mxu0 0.0
      %791 = vmatprep.subr.mxu0 0.0
      %792 = vmatpush1.msra.mxu0 0.0
      %793 = vmatprep.subr.mxu0 0.0
      %794 = vmatpush1.msra.mxu0 0.0
      %795 = vmatprep.subr.mxu0 0.0
      %796 = vmatpush1.msra.mxu0 0.0
      %797 = vmatprep.subr.mxu0 0.0
      %798 = vmatpush1.msra.mxu0 0.0
      %799 = vmatprep.subr.mxu0 0.0
      %800 = vmatpush1.msra.mxu0 0.0
      %801 = vmatprep.mubr.f32.mxu0 0.0
      %802 = vmatmul.mubr.f32.gmra.mrb[0].mxu0 %v684
      %v803 = vpop.f32.mrb[0].mxu0
      %v804 = vadd.f32 0.0, %v803
      %v805 = vpop.f32.mrb[0].mxu0
      %806 = vmatprep.mubr.f32.mxu0 0.0
      %807 = vmatmul.mubr.f32.gmra.mrb[0].mxu0 %v687
      %v808 = vpop.f32.mrb[0].mxu0
      %v809 = vadd.f32 0.0, %v808
      %v810 = vpop.f32.mrb[0].mxu0
      %811 = vmatprep.mubr.f32.mxu0 0.0
      %812 = vmatmul.mubr.f32.gmra.mrb[0].mxu0 %v690
      %v813 = vpop.f32.mrb[0].mxu0
      %v814 = vadd.f32 0.0, %v813
      %v815 = vpop.f32.mrb[0].mxu0
      %816 = vmatprep.mubr.f32.mxu0 0.0
      %817 = vmatmul.mubr.f32.gmra.mrb[0].mxu0 %v693
      %v818 = vpop.f32.mrb[0].mxu0
      %v819 = vadd.f32 0.0, %v818
      %v820 = vpop.f32.mrb[0].mxu0
      %821 = vmatprep.mubr.f32.mxu0 0.0
      %822 = vmatmul.mubr.f32.gmra.mrb[0].mxu0 %v696
      %v823 = vpop.f32.mrb[0].mxu0
      %v824 = vadd.f32 0.0, %v823
      %v825 = vpop.f32.mrb[0].mxu0
      %826 = vmatprep.mubr.f32.mxu0 0.0
      %827 = vmatmul.mubr.f32.gmra.mrb[0].mxu0 %v699
      %v828 = vpop.f32.mrb[0].mxu0
      %v829 = vadd.f32 0.0, %v828
      %v830 = vpop.f32.mrb[0].mxu0
      %831 = vmatprep.mubr.f32.mxu0 0.0
      %832 = vmatmul.mubr.f32.gmra.mrb[0].mxu0 %v702
      %v833 = vpop.f32.mrb[0].mxu0
      %v834 = vadd.f32 0.0, %v833
      %v835 = vpop.f32.mrb[0].mxu0
      %836 = vmatprep.mubr.f32.mxu0 0.0
      %837 = vmatmul.mubr.f32.gmra.mrb[0].mxu0 %v705
      %v838 = vpop.f32.mrb[0].mxu0
      %v839 = vadd.f32 0.0, %v838
      %v840 = vpop.f32.mrb[0].mxu0
      %841 = vmatprep.mubr.f32.mxu0 0.0
      %842 = vmatmul.mubr.f32.gmra.mrb[0].mxu0 %v708
      %v843 = vpop.f32.mrb[0].mxu0
      %v844 = vadd.f32 0.0, %v843
      %v845 = vpop.f32.mrb[0].mxu0
      %846 = vmatprep.mubr.f32.mxu0 0.0
      %847 = vmatmul.mubr.f32.gmra.mrb[0].mxu0 %v711
      %v848 = vpop.f32.mrb[0].mxu0
      %v849 = vadd.f32 0.0, %v848
      %v850 = vpop.f32.mrb[0].mxu0
      %851 = vmatprep.mubr.f32.mxu0 0.0
      %852 = vmatmul.mubr.f32.gmra.mrb[0].mxu0 %v714
      %v853 = vpop.f32.mrb[0].mxu0
      %v854 = vadd.f32 0.0, %v853
      %v855 = vpop.f32.mrb[0].mxu0
      %856 = vmatprep.mubr.f32.mxu0 0.0
      %857 = vmatmul.mubr.f32.gmra.mrb[0].mxu0 %v717
      %v858 = vpop.f32.mrb[0].mxu0
      %v859 = vadd.f32 0.0, %v858
      %v860 = vpop.f32.mrb[0].mxu0
      %861 = vmatprep.mubr.f32.mxu0 0.0
      %862 = vmatmul.mubr.f32.gmra.mrb[0].mxu0 %v720
      %v863 = vpop.f32.mrb[0].mxu0
      %v864 = vadd.f32 0.0, %v863
      %v865 = vpop.f32.mrb[0].mxu0
      %866 = vmatprep.mubr.f32.mxu0 0.0
      %867 = vmatmul.mubr.f32.gmra.mrb[0].mxu0 %v723
      %v868 = vpop.f32.mrb[0].mxu0
      %v869 = vadd.f32 0.0, %v868
      %v870 = vpop.f32.mrb[0].mxu0
      %871 = vmatprep.mubr.f32.mxu0 0.0
      %872 = vmatmul.mubr.f32.gmra.mrb[0].mxu0 %v726
      %v873 = vpop.f32.mrb[0].mxu0
      %v874 = vadd.f32 0.0, %v873
      %v875 = vpop.f32.mrb[0].mxu0
      %876 = vmatprep.mubr.f32.mxu0 0.0
      %877 = vmatmul.mubr.f32.gmra.mrb[0].mxu0 %v729
      %v878 = vpop.f32.mrb[0].mxu0
      %v879 = vadd.f32 0.0, %v878
      %v880 = vpop.f32.mrb[0].mxu0
      %881 = vmatprep.mubr.f32.mxu0 0.0
      %882 = vmatmul.mubr.f32.gmra.mrb[0].mxu0 %v732
      %v883 = vpop.f32.mrb[0].mxu0
      %v884 = vadd.f32 0.0, %v883
      %v885 = vpop.f32.mrb[0].mxu0
      %886 = vmatprep.mubr.f32.mxu0 0.0
      %887 = vmatmul.mubr.f32.gmra.mrb[0].mxu0 %v735
      %v888 = vpop.f32.mrb[0].mxu0
      %v889 = vadd.f32 0.0, %v888
      %v890 = vpop.f32.mrb[0].mxu0
      %891 = vdwg.mxu0
      %v892 = vadd.f32 %v573, %v804
      %v893 = vadd.f32 %v578, %v809
      %v894 = vadd.f32 %v583, %v814
      %v895 = vadd.f32 %v588, %v819
      %v896 = vadd.f32 %v593, %v824
      %v897 = vadd.f32 %v598, %v829
      %v898 = vadd.f32 %v603, %v834
      %v899 = vadd.f32 %v608, %v839
      %v900 = vadd.f32 %v613, %v844
      %v901 = vadd.f32 %v618, %v849
      %v902 = vadd.f32 %v623, %v854
      %v903 = vadd.f32 %v628, %v859
      %v904 = vadd.f32 %v633, %v864
      %v905 = vadd.f32 %v638, %v869
      %v906 = vadd.f32 %v643, %v874
      %v907 = vadd.f32 %v648, %v879
      %v908 = vadd.f32 %v653, %v884
      %v909 = vadd.f32 %v658, %v889
      %910 = vst [vmem:[%s197] sm:$0xff] %v892
      %911 = vst [vmem:[%s197 + $0x8] sm:$0xff] %v893
      %912 = vst [vmem:[%s197 + $0x10] sm:$0xff] %v894
      %913 = vst [vmem:[%s197 + $0x18] sm:$0xff] %v895
      %914 = vst [vmem:[%s197 + $0x20] sm:$0xff] %v896
      %915 = vst [vmem:[%s197 + $0x28] sm:$0xff] %v897
      %916 = vst [vmem:[%s197 + $0x30] sm:$0xff] %v898
      %917 = vst [vmem:[%s197 + $0x38] sm:$0xff] %v899
      %918 = vst [vmem:[%s197 + $0x40] sm:$0xff] %v900
      %919 = vst [vmem:[%s197 + $0x48] sm:$0xff] %v901
      %920 = vst [vmem:[%s197 + $0x50] sm:$0xff] %v902
      %921 = vst [vmem:[%s197 + $0x58] sm:$0xff] %v903
      %922 = vst [vmem:[%s197 + $0x60] sm:$0xff] %v904
      %923 = vst [vmem:[%s197 + $0x68] sm:$0xff] %v905
      %924 = vst [vmem:[%s197 + $0x70] sm:$0xff] %v906
      %925 = vst [vmem:[%s197 + $0x78] sm:$0xff] %v907
      %926 = vst [vmem:[%s197 + $0x80] sm:$0xff] %v908
      %927 = vst [vmem:[%s197 + $0x88] sm:$0x3f] %v909
      %928 = vst [vmem:[%s197 + $0x8e] sm:$0x3] 0.0
      %p929 = scmp.eq.s32.totalorder %s16, 0
      // Predicated region
      $region33: #{_base_double_conv.6} parent=31 // pred_check
        %p930 = pneg %p929
      $region34: #{_base_double_conv.6} parent=31 // pred_check_branch
        %932 = sbr.rel (%p930) target = $region36
      $region35: #{_base_double_conv.6} parent=31 // pred_region
        %933 = vst [vmem:[%s4] sm:$0x3] 0.0
      $region36: #{_base_double_conv.6} parent=31 // pred_fallthru
        _
      %v934 = vld [vmem:[%s2] sm:$0xff]
      %v935 = vld [vmem:[%s2 + $0x8] sm:$0xff]
      %v936 = vld [vmem:[%s2 + $0x10] sm:$0xff]
      %v937 = vld [vmem:[%s2 + $0x18] sm:$0xff]
      %v938 = vld [vmem:[%s2 + $0x20] sm:$0xff]
      %v939 = vld [vmem:[%s2 + $0x28] sm:$0xff]
      %v940 = vld [vmem:[%s2 + $0x30] sm:$0xff]
      %v941 = vld [vmem:[%s2 + $0x38] sm:$0xff]
      %v942 = vld [vmem:[%s2 + $0x40] sm:$0xff]
      %v943 = vld [vmem:[%s2 + $0x48] sm:$0xff]
      %v944 = vld [vmem:[%s2 + $0x50] sm:$0xff]
      %v945 = vld [vmem:[%s2 + $0x58] sm:$0xff]
      %v946 = vld [vmem:[%s2 + $0x60] sm:$0xff]
      %v947 = vld [vmem:[%s2 + $0x68] sm:$0xff]
      %v948 = vld [vmem:[%s2 + $0x70] sm:$0xff]
      %v949 = vld [vmem:[%s2 + $0x78] sm:$0xff]
      %v950 = vld [vmem:[%s2 + $0x80] sm:$0xff]
      %v951 = vld [vmem:[%s2 + $0x88] sm:$0x3f]
      %953 = vset.pattern.permute.xlu0 0
      %954 = vperm.xlu0 %953, %v934
      %v955 = vpop.permute.xlu0 %954
      %958 = vset.pattern.permute.xlu0 0
      %959 = vperm.xlu0 %958, %v935
      %v960 = vpop.permute.xlu0 %959
      %963 = vset.pattern.permute.xlu0 0
      %964 = vperm.xlu0 %963, %v936
      %v965 = vpop.permute.xlu0 %964
      %968 = vset.pattern.permute.xlu0 0
      %969 = vperm.xlu0 %968, %v937
      %v970 = vpop.permute.xlu0 %969
      %973 = vset.pattern.permute.xlu0 0
      %974 = vperm.xlu0 %973, %v938
      %v975 = vpop.permute.xlu0 %974
      %978 = vset.pattern.permute.xlu0 0
      %979 = vperm.xlu0 %978, %v939
      %v980 = vpop.permute.xlu0 %979
      %983 = vset.pattern.permute.xlu0 0
      %984 = vperm.xlu0 %983, %v940
      %v985 = vpop.permute.xlu0 %984
      %988 = vset.pattern.permute.xlu0 0
      %989 = vperm.xlu0 %988, %v941
      %v990 = vpop.permute.xlu0 %989
      %993 = vset.pattern.permute.xlu0 0
      %994 = vperm.xlu0 %993, %v942
      %v995 = vpop.permute.xlu0 %994
      %998 = vset.pattern.permute.xlu0 0
      %999 = vperm.xlu0 %998, %v943
      %v1000 = vpop.permute.xlu0 %999
      %1003 = vset.pattern.permute.xlu0 0
      %1004 = vperm.xlu0 %1003, %v944
      %v1005 = vpop.permute.xlu0 %1004
      %1008 = vset.pattern.permute.xlu0 0
      %1009 = vperm.xlu0 %1008, %v945
      %v1010 = vpop.permute.xlu0 %1009
      %1013 = vset.pattern.permute.xlu0 0
      %1014 = vperm.xlu0 %1013, %v946
      %v1015 = vpop.permute.xlu0 %1014
      %1018 = vset.pattern.permute.xlu0 0
      %1019 = vperm.xlu0 %1018, %v947
      %v1020 = vpop.permute.xlu0 %1019
      %1023 = vset.pattern.permute.xlu0 0
      %1024 = vperm.xlu0 %1023, %v948
      %v1025 = vpop.permute.xlu0 %1024
      %1028 = vset.pattern.permute.xlu0 0
      %1029 = vperm.xlu0 %1028, %v949
      %v1030 = vpop.permute.xlu0 %1029
      %1033 = vset.pattern.permute.xlu0 0
      %1034 = vperm.xlu0 %1033, %v950
      %v1035 = vpop.permute.xlu0 %1034
      %1038 = vset.pattern.permute.xlu0 0
      %1039 = vperm.xlu0 %1038, %v951
      %v1040 = vpop.permute.xlu0 %1039
      %v1042 = vmul.f32 %v892, %v955
      %v1043 = vmul.f32 %v893, %v960
      %v1044 = vmul.f32 %v894, %v965
      %v1045 = vmul.f32 %v895, %v970
      %v1046 = vmul.f32 %v896, %v975
      %v1047 = vmul.f32 %v897, %v980
      %v1048 = vmul.f32 %v898, %v985
      %v1049 = vmul.f32 %v899, %v990
      %v1050 = vmul.f32 %v900, %v995
      %v1051 = vmul.f32 %v901, %v1000
      %v1052 = vmul.f32 %v902, %v1005
      %v1053 = vmul.f32 %v903, %v1010
      %v1054 = vmul.f32 %v904, %v1015
      %v1055 = vmul.f32 %v905, %v1020
      %v1056 = vmul.f32 %v906, %v1025
      %v1057 = vmul.f32 %v907, %v1030
      %v1058 = vmul.f32 %v908, %v1035
      %v1059 = vmul.f32 %v909, %v1040
      %v1060 = vld [vmem:[%s4] sm:$0x1]
      %v1061 = vadd.f32 %v1042, %v1043
      %v1062 = vadd.f32 %v1061, %v1044
      %v1063 = vadd.f32 %v1062, %v1045
      %v1064 = vadd.f32 %v1063, %v1046
      %v1065 = vadd.f32 %v1064, %v1047
      %v1066 = vadd.f32 %v1065, %v1048
      %v1067 = vadd.f32 %v1066, %v1049
      %v1068 = vadd.f32 %v1067, %v1050
      %v1069 = vadd.f32 %v1068, %v1051
      %v1070 = vadd.f32 %v1069, %v1052
      %v1071 = vadd.f32 %v1070, %v1053
      %v1072 = vadd.f32 %v1071, %v1054
      %v1073 = vadd.f32 %v1072, %v1055
      %v1074 = vadd.f32 %v1073, %v1056
      %v1075 = vadd.f32 %v1074, %v1057
      %v1076 = vadd.f32 %v1075, %v1058
      %vm1077 = vcmask 1045504
      %v1078 = vsel %vm1077, %v1059, 0.0
      %v1079 = vadd.f32 %v1076, %v1078
      %v1080 = vrot.slane %v1079, 4
      %v1081 = vadd.f32 %v1079, %v1080
      %v1082 = vrot.slane %v1081, 2
      %v1083 = vadd.f32 %v1081, %v1082
      %v1084 = vrot.slane %v1083, 1
      %v1085 = vadd.f32 %v1083, %v1084
      %v1086 = vadd.f32 %v1060, %v1085
      %1087 = vst [vmem:[%s4] sm:$0x1] %v1086
      %v1088 = vld [vmem:[%s4 + $0x1] sm:$0x1]
      %v1089 = vmul.f32 %v1042, %v892
      %v1090 = vmul.f32 %v1043, %v893
      %v1091 = vmul.f32 %v1044, %v894
      %v1092 = vmul.f32 %v1045, %v895
      %v1093 = vmul.f32 %v1046, %v896
      %v1094 = vmul.f32 %v1047, %v897
      %v1095 = vmul.f32 %v1048, %v898
      %v1096 = vmul.f32 %v1049, %v899
      %v1097 = vmul.f32 %v1050, %v900
      %v1098 = vmul.f32 %v1051, %v901
      %v1099 = vmul.f32 %v1052, %v902
      %v1100 = vmul.f32 %v1053, %v903
      %v1101 = vmul.f32 %v1054, %v904
      %v1102 = vmul.f32 %v1055, %v905
      %v1103 = vmul.f32 %v1056, %v906
      %v1104 = vmul.f32 %v1057, %v907
      %v1105 = vmul.f32 %v1058, %v908
      %v1106 = vmul.f32 %v1059, %v909
      %v1107 = vadd.f32 %v1089, %v1090
      %v1108 = vadd.f32 %v1107, %v1091
      %v1109 = vadd.f32 %v1108, %v1092
      %v1110 = vadd.f32 %v1109, %v1093
      %v1111 = vadd.f32 %v1110, %v1094
      %v1112 = vadd.f32 %v1111, %v1095
      %v1113 = vadd.f32 %v1112, %v1096
      %v1114 = vadd.f32 %v1113, %v1097
      %v1115 = vadd.f32 %v1114, %v1098
      %v1116 = vadd.f32 %v1115, %v1099
      %v1117 = vadd.f32 %v1116, %v1100
      %v1118 = vadd.f32 %v1117, %v1101
      %v1119 = vadd.f32 %v1118, %v1102
      %v1120 = vadd.f32 %v1119, %v1103
      %v1121 = vadd.f32 %v1120, %v1104
      %v1122 = vadd.f32 %v1121, %v1105
      %v1123 = vsel %vm1077, %v1106, 0.0
      %v1124 = vadd.f32 %v1122, %v1123
      %v1125 = vrot.slane %v1124, 4
      %v1126 = vadd.f32 %v1124, %v1125
      %v1127 = vrot.slane %v1126, 2
      %v1128 = vadd.f32 %v1126, %v1127
      %v1129 = vrot.slane %v1128, 1
      %v1130 = vadd.f32 %v1128, %v1129
      %v1131 = vadd.f32 %v1088, %v1130
      %1132 = vst [vmem:[%s4 + $0x1] sm:$0x1] %v1131
      %s1133 = smul.u32 18, %s16
      %p1134 = scmp.lt.s32.totalorder %s1133, 71
      %s1135 = scalar_select %p1134, %s1133, 71
      %s1136 = smul.addr %s1135, 8
      %s1137 = scalar_lea.vmem %s3, %s1136
      // Predicated region
      $region37: #{_base_double_conv.6} parent=31 // pred_check
        %p1138 = pneg %p102
      $region38: #{_base_double_conv.6} parent=31 // pred_check_branch
        %1140 = sbr.rel (%p1138) target = $region40
      $region39: #{_base_double_conv.6} parent=31 // pred_region
        %s1141 = smul.u32 18, %s16
      $region40: #{_base_double_conv.6} parent=31 // pred_fallthru
        _
      // Predicated region
      $region41: #{_base_double_conv.6} parent=31 // pred_check
        %p1142 = pneg %p123
      $region42: #{_base_double_conv.6} parent=31 // pred_check_branch
        %1144 = sbr.rel (%p1142) target = $region44
      $region43: #{_base_double_conv.6} parent=31 // pred_region
        _
      $region44: #{_base_double_conv.6} parent=31 // pred_fallthru
        _
      // Predicated region
      $region45: #{_base_double_conv.6} parent=31 // pred_check
        %p1145 = pneg %p123
      $region46: #{_base_double_conv.6} parent=31 // pred_check_branch
        %1147 = sbr.rel (%p1145) target = $region48
      $region47: #{_base_double_conv.6} parent=31 // pred_region
        _
      $region48: #{_base_double_conv.6} parent=31 // pred_fallthru
        _
    $region32: #{_base_double_conv.6} parent=5 // pred_fallthru
      _
    %p1148 = scmp.le.s32.totalorder 2, %s11
    // Predicated region
    $region49: #{_base_double_conv.6} parent=5 // pred_check
      %p1149 = pneg %p1148
    $region50: #{_base_double_conv.6} parent=5 // pred_check_branch
      %1151 = sbr.rel (%p1149) target = $region52
    $region51: #{_base_double_conv.6} parent=5 // pred_region
      %s1152 = ssub.s32 %s11, 2
      // Predicated region
      $region53: #{_base_double_conv.6} parent=51 // pred_check
        %p1153 = pneg %p108
      $region54: #{_base_double_conv.6} parent=51 // pred_check_branch
        %1155 = sbr.rel (%p1153) target = $region56
      $region55: #{_base_double_conv.6} parent=51 // pred_region
        %s1156 = smul.u32 18, %s17
        %p1157 = scmp.lt.s32.totalorder %s1156, 71
        %s1158 = scalar_select %p1157, %s1156, 71
        %s1159 = smul.addr %s1158, 8
        %s1160 = scalar_lea.vmem %s3, %s1159
      $region56: #{_base_double_conv.6} parent=51 // pred_fallthru
        _
    $region52: #{_base_double_conv.6} parent=5 // pred_fallthru
      _
  $region6: #{_base_double_conv.6} parent=0 // loop_footer
    %s15 = sadd.s32 1, %s11
  $region7: #{_base_double_conv.6} parent=0 // loop_footer_branch
    %10 = sbr.rel target = $region3
  $region8: #{_base_double_conv.6} parent=0 // loop_exit
    _

</llo_original>
